<compile_context>
chip_gen: v5e
topology: v5e:2x2
jax: 0.10.0
libtpu: 0.0.40
codegen_flags: <defaults>
</compile_context>

<pallas_src>
import jax
import jax.numpy as jnp
from jax import lax
from jax.experimental import pallas as pl
from jax.experimental.pallas import tpu as pltpu


def _make_kernel(inv_batch):
    """Build the kernel with the (static) 1/total_batch constant baked in."""

    def kernel(x_ref, w1_ref, gamma_ref, beta_ref, w2_ref, b2_ref,
               o_ref, shift_ref, scale_ref):
        # shift_ref / scale_ref: VMEM scratch (1, D_HID) f32.
        #   phase 0: running sum / running sum-of-squares of h over the batch.
        #   phase 1: repurposed to hold the folded BN shift / scale.
        phase = pl.program_id(0)
        i = pl.program_id(1)

        @pl.when((phase == 0) & (i == 0))
        def _init_stats():
            shift_ref[...] = jnp.zeros_like(shift_ref)
            scale_ref[...] = jnp.zeros_like(scale_ref)

        # First Linear (no bias): bf16 operands on the MXU, f32 accumulation.
        h = jnp.dot(x_ref[...], w1_ref[...], preferred_element_type=jnp.float32)

        @pl.when(phase == 0)
        def _accumulate_stats():
            # Single pass over h: per-feature sum and sum-of-squares (axis-0 reduce).
            shift_ref[...] += jnp.sum(h, axis=0, keepdims=True)
            scale_ref[...] += jnp.sum(h * h, axis=0, keepdims=True)

        @pl.when(phase == 1)
        def _apply():
            @pl.when(i == 0)
            def _fold_bn():
                mean = shift_ref[...] * inv_batch
                var = jnp.maximum(scale_ref[...] * inv_batch - mean * mean, 0.0)
                scale = gamma_ref[...] * lax.rsqrt(var + 1e-5)   # EUP rsqrt
                scale_ref[...] = scale
                shift_ref[...] = beta_ref[...] - mean * scale

            # BN folded into a single FMA, then ReLU.
            h_act = jnp.maximum(h * scale_ref[...] + shift_ref[...], 0.0)
            # Second Linear (with bias): bf16 operands, f32 accumulation.
            out = jnp.dot(h_act.astype(jnp.bfloat16), w2_ref[...],
                          preferred_element_type=jnp.float32) + b2_ref[...]
            o_ref[...] = out.astype(o_ref.dtype)

    return kernel


def projection_head_forward(x, w1, gamma, beta, w2, b2, *, batch_tile=128):
    B, D_IN = x.shape
    D_HID = w1.shape[1]
    D_OUT = w2.shape[1]
    tb = min(batch_tile, B)
    assert B % tb == 0, "batch must be divisible by the batch tile"
    n_tiles = B // tb

    # bf16 operands halve HBM->VMEM bytes; accumulation stays f32 inside the kernel.
    x_bf = x.astype(jnp.bfloat16)
    w1_bf = w1.astype(jnp.bfloat16)
    w2_bf = w2.astype(jnp.bfloat16)

    kernel = _make_kernel(1.0 / float(B))

    # Advisory cost estimate (x@W1 is computed in both phases).
    flops = 2 * B * D_IN * D_HID * 2 + 2 * B * D_HID * D_OUT
    bytes_accessed = (2 * B * D_IN * 2          # x tiles, read in both phases (bf16)
                      + D_IN * D_HID * 2        # w1 (bf16, resident)
                      + D_HID * D_OUT * 2       # w2 (bf16, resident)
                      + 2 * D_HID * 4           # gamma, beta (f32)
                      + D_OUT * 4               # b2 (f32)
                      + B * D_OUT * 4)          # output (f32)

    grid_spec = pltpu.PrefetchScalarGridSpec(
        num_scalar_prefetch=0,
        grid=(2, n_tiles),                       # (phase, batch tile)
        in_specs=[
            pl.BlockSpec((tb, D_IN), lambda p, i: (i, 0)),      # x: tile over batch
            pl.BlockSpec((D_IN, D_HID), lambda p, i: (0, 0)),   # w1: resident
            pl.BlockSpec((1, D_HID), lambda p, i: (0, 0)),      # gamma: resident
            pl.BlockSpec((1, D_HID), lambda p, i: (0, 0)),      # beta: resident
            pl.BlockSpec((D_HID, D_OUT), lambda p, i: (0, 0)),  # w2: resident
            pl.BlockSpec((1, D_OUT), lambda p, i: (0, 0)),      # b2: resident
        ],
        # i*p keeps the output block pinned at (0,0) during phase 0 (never written,
        # never flushed) and tracks the batch tile during phase 1 (real writes only).
        out_specs=pl.BlockSpec((tb, D_OUT), lambda p, i: (i * p, 0)),
        scratch_shapes=[
            pltpu.VMEM((1, D_HID), jnp.float32),   # running sum  -> folded BN shift
            pltpu.VMEM((1, D_HID), jnp.float32),   # running sumsq -> folded BN scale
        ],
    )

    return pl.pallas_call(
        kernel,
        out_shape=jax.ShapeDtypeStruct((B, D_OUT), jnp.float32),
        grid_spec=grid_spec,
        # Both axes "arbitrary": phase order is a dependency and the BN stats scratch
        # must see every batch tile (per-core splitting would corrupt the statistics).
        compiler_params=pltpu.CompilerParams(
            dimension_semantics=("arbitrary", "arbitrary"),
            vmem_limit_bytes=64 * 1024 * 1024),
        cost_estimate=pl.CostEstimate(
            flops=flops, transcendentals=D_HID, bytes_accessed=bytes_accessed),
    )(x_bf, w1_bf, gamma, beta, w2_bf, b2)


def make_params(key, d_in, d_hid, d_out):
    """Deterministic parameter init (kaiming-uniform-like bounds, like nn.Linear)."""
    k1, k2, k3 = jax.random.split(key, 3)
    bound1 = 1.0 / jnp.sqrt(d_in)
    w1 = jax.random.uniform(k1, (d_in, d_hid), jnp.float32, -bound1, bound1)
    gamma = jnp.ones((1, d_hid), jnp.float32)    # BatchNorm1d init
    beta = jnp.zeros((1, d_hid), jnp.float32)
    bound2 = 1.0 / jnp.sqrt(d_hid)
    w2 = jax.random.uniform(k2, (d_hid, d_out), jnp.float32, -bound2, bound2)
    b2 = jax.random.uniform(k3, (1, d_out), jnp.float32, -bound2, bound2)
    return w1, gamma, beta, w2, b2


def reference_forward(x, w1, gamma, beta, w2, b2):
    """Pure-JAX reference using the same precision strategy as the kernel."""
    h = jnp.dot(x.astype(jnp.bfloat16), w1.astype(jnp.bfloat16),
                preferred_element_type=jnp.float32)
    mean = jnp.mean(h, axis=0, keepdims=True)
    var = jnp.maximum(jnp.mean(h * h, axis=0, keepdims=True) - mean * mean, 0.0)
    scale = gamma * lax.rsqrt(var + 1e-5)
    shift = beta - mean * scale
    h = jnp.maximum(h * scale + shift, 0.0)
    return jnp.dot(h.astype(jnp.bfloat16), w2.astype(jnp.bfloat16),
                   preferred_element_type=jnp.float32) + b2


if __name__ == "__main__":
    # Docstring-example head sizes (lane-dense); small batch with 2 batch tiles.
    B, D_IN, D_HID, D_OUT = 256, 256, 256, 128
    key = jax.random.PRNGKey(0)
    kx, kp = jax.random.split(key)
    x = jax.random.normal(kx, (B, D_IN), jnp.float32)
    w1, gamma, beta, w2, b2 = make_params(kp, D_IN, D_HID, D_OUT)

    out = projection_head_forward(x, w1, gamma, beta, w2, b2, batch_tile=128)
    out = jax.block_until_ready(out)

    ref = reference_forward(x, w1, gamma, beta, w2, b2)
    assert out.shape == (B, D_OUT)
    max_err = float(jnp.max(jnp.abs(out - ref)))
    assert jnp.allclose(out, ref, atol=2e-2, rtol=2e-2), (
        f"mismatch vs reference (max abs err {max_err})")
    print("KERNEL_OK")
</pallas_src>

<mosaic_0001>
module attributes {stable_mosaic.version = 11 : i64} {
  func.func @kernel(%arg0: i32, %arg1: i32, %arg2: memref<128x256xbf16, #tpu.memory_space<vmem>>, %arg3: memref<256x256xbf16, #tpu.memory_space<vmem>>, %arg4: memref<1x256xf32, #tpu.memory_space<vmem>>, %arg5: memref<1x256xf32, #tpu.memory_space<vmem>>, %arg6: memref<256x128xbf16, #tpu.memory_space<vmem>>, %arg7: memref<1x128xf32, #tpu.memory_space<vmem>>, %arg8: memref<128x128xf32, #tpu.memory_space<vmem>>, %arg9: memref<1x256xf32, #tpu.memory_space<vmem>>, %arg10: memref<1x256xf32, #tpu.memory_space<vmem>>) attributes {dimension_semantics = [#tpu.dimension_semantics<arbitrary>, #tpu.dimension_semantics<arbitrary>], iteration_bounds = array<i64: 2, 2>, scalar_prefetch = 0 : i64, scratch_operands = 2 : i64, tpu.core_type = #tpu.core_type<tc>, window_params = [{transform_indices = @transform_0, window_bounds = array<i64: 128, 256>}, {pipeline_mode = #tpu.pipeline_mode<synchronous>, transform_indices = @transform_1, window_bounds = array<i64: 256, 256>}, {pipeline_mode = #tpu.pipeline_mode<synchronous>, transform_indices = @transform_2, window_bounds = array<i64: 1, 256>}, {pipeline_mode = #tpu.pipeline_mode<synchronous>, transform_indices = @transform_3, window_bounds = array<i64: 1, 256>}, {pipeline_mode = #tpu.pipeline_mode<synchronous>, transform_indices = @transform_4, window_bounds = array<i64: 256, 128>}, {pipeline_mode = #tpu.pipeline_mode<synchronous>, transform_indices = @transform_5, window_bounds = array<i64: 1, 128>}, {transform_indices = @transform_6, window_bounds = array<i64: 128, 128>}]} {
    %c0_i32 = arith.constant 0 : i32
    %0 = arith.cmpi eq, %arg0, %c0_i32 : i32
    %c0_i32_0 = arith.constant 0 : i32
    %1 = arith.cmpi eq, %arg1, %c0_i32_0 : i32
    %2 = arith.andi %0, %1 : i1
    %3 = arith.extui %2 : i1 to i32
    %c0_i32_1 = arith.constant 0 : i32
    %4 = arith.cmpi ne, %3, %c0_i32_1 : i32
    scf.if %4 {
      %cst_8 = arith.constant 0.000000e+00 : f32
      %14 = vector.broadcast %cst_8 : f32 to vector<1x256xf32>
      %c0_9 = arith.constant 0 : index
      %c0_10 = arith.constant 0 : index
      %15 = vector.load %arg9[%c0_9, %c0_10] : memref<1x256xf32, #tpu.memory_space<vmem>>, vector<1x256xf32>
      tpu.vector_store %arg9[%c0_9, %c0_10], %14 {strides = array<i32>} : memref<1x256xf32, #tpu.memory_space<vmem>>, vector<1x256xf32>,
      %cst_11 = arith.constant 0.000000e+00 : f32
      %16 = vector.broadcast %cst_11 : f32 to vector<1x256xf32>
      %c0_12 = arith.constant 0 : index
      %c0_13 = arith.constant 0 : index
      %17 = vector.load %arg10[%c0_12, %c0_13] : memref<1x256xf32, #tpu.memory_space<vmem>>, vector<1x256xf32>
      tpu.vector_store %arg10[%c0_12, %c0_13], %16 {strides = array<i32>} : memref<1x256xf32, #tpu.memory_space<vmem>>, vector<1x256xf32>,
    } else {
    }
    %c0 = arith.constant 0 : index
    %c0_2 = arith.constant 0 : index
    %5 = vector.load %arg2[%c0, %c0_2] : memref<128x256xbf16, #tpu.memory_space<vmem>>, vector<128x256xbf16>
    %c0_3 = arith.constant 0 : index
    %c0_4 = arith.constant 0 : index
    %6 = vector.load %arg3[%c0_3, %c0_4] : memref<256x256xbf16, #tpu.memory_space<vmem>>, vector<256x256xbf16>
    %cst = arith.constant dense<0.000000e+00> : vector<128x256xf32>
    %7 = tpu.matmul %5, %6, %cst {dimension_numbers = #tpu.dot_dimension_numbers<[1], [0], [0], [1], [0, 0, 1, 1], [], []>} : vector<128x256xbf16>, vector<256x256xbf16>, vector<128x256xf32> -> vector<128x256xf32>
    %c0_i32_5 = arith.constant 0 : i32
    %8 = arith.cmpi eq, %arg0, %c0_i32_5 : i32
    %9 = arith.extui %8 : i1 to i32
    %c0_i32_6 = arith.constant 0 : i32
    %10 = arith.cmpi ne, %9, %c0_i32_6 : i32
    scf.if %10 {
      %c0_8 = arith.constant 0 : index
      %c0_9 = arith.constant 0 : index
      %14 = vector.load %arg9[%c0_8, %c0_9] : memref<1x256xf32, #tpu.memory_space<vmem>>, vector<1x256xf32>
      %cst_10 = arith.constant dense<0.000000e+00> : vector<256xf32>
      %15 = vector.multi_reduction <add>, %7, %cst_10 [0] : vector<128x256xf32> to vector<256xf32>
      %16 = vector.shape_cast %15 : vector<256xf32> to vector<1x256xf32>
      %17 = arith.addf %14, %16 : vector<1x256xf32>
      %c0_11 = arith.constant 0 : index
      %c0_12 = arith.constant 0 : index
      %18 = vector.load %arg9[%c0_11, %c0_12] : memref<1x256xf32, #tpu.memory_space<vmem>>, vector<1x256xf32>
      tpu.vector_store %arg9[%c0_11, %c0_12], %17 {strides = array<i32>} : memref<1x256xf32, #tpu.memory_space<vmem>>, vector<1x256xf32>,
      %c0_13 = arith.constant 0 : index
      %c0_14 = arith.constant 0 : index
      %19 = vector.load %arg10[%c0_13, %c0_14] : memref<1x256xf32, #tpu.memory_space<vmem>>, vector<1x256xf32>
      %20 = arith.mulf %7, %7 : vector<128x256xf32>
      %cst_15 = arith.constant dense<0.000000e+00> : vector<256xf32>
      %21 = vector.multi_reduction <add>, %20, %cst_15 [0] : vector<128x256xf32> to vector<256xf32>
      %22 = vector.shape_cast %21 : vector<256xf32> to vector<1x256xf32>
      %23 = arith.addf %19, %22 : vector<1x256xf32>
      %c0_16 = arith.constant 0 : index
      %c0_17 = arith.constant 0 : index
      %24 = vector.load %arg10[%c0_16, %c0_17] : memref<1x256xf32, #tpu.memory_space<vmem>>, vector<1x256xf32>
      tpu.vector_store %arg10[%c0_16, %c0_17], %23 {strides = array<i32>} : memref<1x256xf32, #tpu.memory_space<vmem>>, vector<1x256xf32>,
    } else {
    }
    %c1_i32 = arith.constant 1 : i32
    %11 = arith.cmpi eq, %arg0, %c1_i32 : i32
    %12 = arith.extui %11 : i1 to i32
    %c0_i32_7 = arith.constant 0 : i32
    %13 = arith.cmpi ne, %12, %c0_i32_7 : i32
    scf.if %13 {
      %c0_i32_8 = arith.constant 0 : i32
      %14 = arith.cmpi eq, %arg1, %c0_i32_8 : i32
      %15 = arith.extui %14 : i1 to i32
      %c0_i32_9 = arith.constant 0 : i32
      %16 = arith.cmpi ne, %15, %c0_i32_9 : i32
      scf.if %16 {
        %c0_22 = arith.constant 0 : index
        %c0_23 = arith.constant 0 : index
        %32 = vector.load %arg9[%c0_22, %c0_23] : memref<1x256xf32, #tpu.memory_space<vmem>>, vector<1x256xf32>
        %cst_24 = arith.constant 3.906250e-03 : f32
        %33 = vector.broadcast %cst_24 : f32 to vector<1x256xf32>
        %34 = arith.mulf %32, %33 : vector<1x256xf32>
        %c0_25 = arith.constant 0 : index
        %c0_26 = arith.constant 0 : index
        %35 = vector.load %arg10[%c0_25, %c0_26] : memref<1x256xf32, #tpu.memory_space<vmem>>, vector<1x256xf32>
        %cst_27 = arith.constant 3.906250e-03 : f32
        %36 = vector.broadcast %cst_27 : f32 to vector<1x256xf32>
        %37 = arith.mulf %35, %36 : vector<1x256xf32>
        %38 = arith.mulf %34, %34 : vector<1x256xf32>
        %39 = arith.subf %37, %38 : vector<1x256xf32>
        %cst_28 = arith.constant 0.000000e+00 : f32
        %40 = vector.broadcast %cst_28 : f32 to vector<1x256xf32>
        %41 = arith.maximumf %39, %40 : vector<1x256xf32>
        %c0_29 = arith.constant 0 : index
        %c0_30 = arith.constant 0 : index
        %42 = vector.load %arg4[%c0_29, %c0_30] : memref<1x256xf32, #tpu.memory_space<vmem>>, vector<1x256xf32>
        %cst_31 = arith.constant 9.99999974E-6 : f32
        %43 = vector.broadcast %cst_31 : f32 to vector<1x256xf32>
        %44 = arith.addf %41, %43 : vector<1x256xf32>
        %45 = math.rsqrt %44 : vector<1x256xf32>
        %46 = arith.mulf %42, %45 : vector<1x256xf32>
        %c0_32 = arith.constant 0 : index
        %c0_33 = arith.constant 0 : index
        %47 = vector.load %arg10[%c0_32, %c0_33] : memref<1x256xf32, #tpu.memory_space<vmem>>, vector<1x256xf32>
        tpu.vector_store %arg10[%c0_32, %c0_33], %46 {strides = array<i32>} : memref<1x256xf32, #tpu.memory_space<vmem>>, vector<1x256xf32>,
        %c0_34 = arith.constant 0 : index
        %c0_35 = arith.constant 0 : index
        %48 = vector.load %arg5[%c0_34, %c0_35] : memref<1x256xf32, #tpu.memory_space<vmem>>, vector<1x256xf32>
        %49 = arith.mulf %34, %46 : vector<1x256xf32>
        %50 = arith.subf %48, %49 : vector<1x256xf32>
        %c0_36 = arith.constant 0 : index
        %c0_37 = arith.constant 0 : index
        %51 = vector.load %arg9[%c0_36, %c0_37] : memref<1x256xf32, #tpu.memory_space<vmem>>, vector<1x256xf32>
        tpu.vector_store %arg9[%c0_36, %c0_37], %50 {strides = array<i32>} : memref<1x256xf32, #tpu.memory_space<vmem>>, vector<1x256xf32>,
      } else {
      }
      %c0_10 = arith.constant 0 : index
      %c0_11 = arith.constant 0 : index
      %17 = vector.load %arg10[%c0_10, %c0_11] : memref<1x256xf32, #tpu.memory_space<vmem>>, vector<1x256xf32>
      %18 = vector.broadcast %17 : vector<1x256xf32> to vector<128x256xf32>
      %19 = arith.mulf %7, %18 : vector<128x256xf32>
      %c0_12 = arith.constant 0 : index
      %c0_13 = arith.constant 0 : index
      %20 = vector.load %arg9[%c0_12, %c0_13] : memref<1x256xf32, #tpu.memory_space<vmem>>, vector<1x256xf32>
      %21 = vector.broadcast %20 : vector<1x256xf32> to vector<128x256xf32>
      %22 = arith.addf %19, %21 : vector<128x256xf32>
      %cst_14 = arith.constant 0.000000e+00 : f32
      %23 = vector.broadcast %cst_14 : f32 to vector<128x256xf32>
      %24 = arith.maximumf %22, %23 : vector<128x256xf32>
      %25 = arith.truncf %24 : vector<128x256xf32> to vector<128x256xbf16>
      %c0_15 = arith.constant 0 : index
      %c0_16 = arith.constant 0 : index
      %26 = vector.load %arg6[%c0_15, %c0_16] : memref<256x128xbf16, #tpu.memory_space<vmem>>, vector<256x128xbf16>
      %cst_17 = arith.constant dense<0.000000e+00> : vector<128x128xf32>
      %27 = tpu.matmul %25, %26, %cst_17 {dimension_numbers = #tpu.dot_dimension_numbers<[1], [0], [0], [1], [0, 0, 1, 1], [], []>} : vector<128x256xbf16>, vector<256x128xbf16>, vector<128x128xf32> -> vector<128x128xf32>
      %c0_18 = arith.constant 0 : index
      %c0_19 = arith.constant 0 : index
      %28 = vector.load %arg7[%c0_18, %c0_19] : memref<1x128xf32, #tpu.memory_space<vmem>>, vector<1x128xf32>
      %29 = vector.broadcast %28 : vector<1x128xf32> to vector<128x128xf32>
      %30 = arith.addf %27, %29 : vector<128x128xf32>
      %c0_20 = arith.constant 0 : index
      %c0_21 = arith.constant 0 : index
      %31 = vector.load %arg8[%c0_20, %c0_21] : memref<128x128xf32, #tpu.memory_space<vmem>>, vector<128x128xf32>
      tpu.vector_store %arg8[%c0_20, %c0_21], %30 {strides = array<i32>} : memref<128x128xf32, #tpu.memory_space<vmem>>, vector<128x128xf32>,
    } else {
    }
    return
  }
  func.func @transform_0(%arg0: i32, %arg1: i32) -> (i32, i32) {
    %c0_i32 = arith.constant 0 : i32
    %c0_i32_0 = arith.constant 0 : i32
    return %arg1, %c0_i32 : i32, i32
  }
  func.func @transform_1(%arg0: i32, %arg1: i32) -> (i32, i32) {
    %c0_i32 = arith.constant 0 : i32
    %c0_i32_0 = arith.constant 0 : i32
    %c0_i32_1 = arith.constant 0 : i32
    return %c0_i32, %c0_i32_0 : i32, i32
  }
  func.func @transform_2(%arg0: i32, %arg1: i32) -> (i32, i32) {
    %c0_i32 = arith.constant 0 : i32
    %c0_i32_0 = arith.constant 0 : i32
    %c0_i32_1 = arith.constant 0 : i32
    return %c0_i32, %c0_i32_0 : i32, i32
  }
  func.func @transform_3(%arg0: i32, %arg1: i32) -> (i32, i32) {
    %c0_i32 = arith.constant 0 : i32
    %c0_i32_0 = arith.constant 0 : i32
    %c0_i32_1 = arith.constant 0 : i32
    return %c0_i32, %c0_i32_0 : i32, i32
  }
  func.func @transform_4(%arg0: i32, %arg1: i32) -> (i32, i32) {
    %c0_i32 = arith.constant 0 : i32
    %c0_i32_0 = arith.constant 0 : i32
    %c0_i32_1 = arith.constant 0 : i32
    return %c0_i32, %c0_i32_0 : i32, i32
  }
  func.func @transform_5(%arg0: i32, %arg1: i32) -> (i32, i32) {
    %c0_i32 = arith.constant 0 : i32
    %c0_i32_0 = arith.constant 0 : i32
    %c0_i32_1 = arith.constant 0 : i32
    return %c0_i32, %c0_i32_0 : i32, i32
  }
  func.func @transform_6(%arg0: i32, %arg1: i32) -> (i32, i32) {
    %0 = arith.muli %arg1, %arg0 : i32
    %c0_i32 = arith.constant 0 : i32
    %c0_i32_0 = arith.constant 0 : i32
    return %0, %c0_i32 : i32, i32
  }
}

</mosaic_0001>

<llo_original>
// kernel: tpu_custom_call.1
$region0: #{tpu_custom_call.1}
  #allocation0 [shape = 'u32[]', space=smem, size = 0x4, offset = 0x4, fixed_abs, tag = 'smem constant byte address 0x4 - core index']
  #allocation1 [shape = 'u32[72,128]{1,0:T(1,128)}', space=vmem, size = 0x9000, scoped, tag = 'internal scratch']
  #allocation2 [shape = 'f32[1,256]{1,0:T(1,128)}', space=vmem, size = 0x400, scoped, tag = 'scratch operand']
  #allocation3 [shape = 'f32[1,256]{1,0:T(1,128)}', space=vmem, size = 0x400, scoped, tag = 'scratch operand']
  %s0 = inlined_call_operand.hbm [shape: bf16[256,256], index: 0, kind: input, shape index: {}]
  %s1 = inlined_call_operand.hbm [shape: bf16[256,256], index: 1, kind: input, shape index: {}]
  %s2 = inlined_call_operand.hbm [shape: f32[1,256], index: 2, kind: input, shape index: {}]
  %s3 = inlined_call_operand.vmem [shape: f32[1,256], index: 3, kind: input, shape index: {}]
  %s4 = inlined_call_operand.hbm [shape: bf16[256,128], index: 4, kind: input, shape index: {}]
  %s5 = inlined_call_operand.vmem [shape: f32[1,128], index: 5, kind: input, shape index: {}]
  %s6 = inlined_call_operand.hbm [shape: f32[256,128], index: 6, kind: output, shape index: {}]
  %s7 = sld [smem:[#allocation0]]
  $region89: #{tpu_custom_call.1} parent=0
    _
  %s9 = ssub.s32 1, %s7
  %s10 = scalar_select 0, %s9, %s7
  $region1: #{tpu_custom_call.1} parent=0
    #allocation4 [shape = 'u8[131072]{0}', space=vmem, size = 0x20000, scoped, tag = 'input window, operand 0']
    #allocation5 [shape = 's32[2]{0}', space=sflag, size = 0x8, scoped, tag = 'scoped memory for tpu_custom_call.1']
    #allocation6 [shape = 's32[2]{0}', space=sflag, size = 0x8, scoped, tag = 'scoped memory for tpu_custom_call.1']
    #allocation7 [shape = 'u8[131072]{0}', space=vmem, size = 0x20000, scoped, tag = 'input window, operand 1, single buffered']
    #allocation8 [shape = 's32[1]{0}', space=sflag, size = 0x4, scoped, tag = 'scoped memory for tpu_custom_call.1']
    #allocation9 [shape = 'u8[1024]{0}', space=vmem, size = 0x400, scoped, tag = 'input window, operand 2, single buffered']
    #allocation10 [shape = 'u8[65536]{0}', space=vmem, size = 0x10000, scoped, tag = 'input window, operand 4, single buffered']
    #allocation11 [shape = 's32[1]{0}', space=sflag, size = 0x4, scoped, tag = 'scoped memory for tpu_custom_call.1']
    #allocation12 [shape = 'u8[131072]{0}', space=vmem, size = 0x20000, scoped, tag = 'output window, operand 0']
    %11 = vsyncpa [#allocation5], 0
    %s12 = scalar_lea.sflag [#allocation5], 1
    %13 = vsyncpa %s12, 0
    %14 = vsyncpa [#allocation8], 0
    %15 = vsyncpa [#allocation11], 0
    %16 = vsyncpa [#allocation6], 0
    %s17 = scalar_lea.sflag [#allocation6], 1
    %18 = vsyncpa %s17, 0
    loop: start=0, step=1, limit=6
    $region2: #{tpu_custom_call.1} parent=1 // loop_pre_header
      _
    $region3: #{tpu_custom_call.1} parent=1 // loop_header
      %s20 = sphi 0, %s24
      %p21 = scmp.ge.s32.totalorder %s20, 6
      %s27 = sphi 0, %s39
      %s28 = sphi 0, %s35
      %s29 = sphi 0, %s27
      %s30 = sphi 0, %s28
      %s31 = sphi 0, %s29
      %s32 = sphi 0, %s30
      %s42 = sphi 0, %s44
      %s45 = sphi 0, %s42
      %s46 = sphi 0, %s45
      %s62 = sphi 0, %s46
      %s66 = sphi 0, %s66
      %s68 = sphi 0, %s66
      %s69 = sphi 0, %s68
      %s83 = sphi 0, %s69
      %s87 = sphi 0, %s87
      %s89 = sphi 0, %s87
      %s90 = sphi 0, %s89
      %s104 = sphi 0, %s90
      %s108 = sphi 0, %s108
      %s110 = sphi 0, %s108
      %s111 = sphi 0, %s110
      %s125 = sphi 0, %s111
      %s129 = sphi 0, %s129
      %s131 = sphi 0, %s129
      %s132 = sphi 0, %s131
      %s146 = sphi 0, %s132
      %s150 = sphi 0, %s150
      %s152 = sphi 0, %s150
      %s153 = sphi 0, %s152
      %s167 = sphi 0, %s153
      %s175 = sphi 0, %s177
      %s178 = sphi 0, %s175
      %s179 = sphi 0, %s178
      %s195 = sphi 0, %s179
    $region4: #{tpu_custom_call.1} parent=1 // loop_header_branch
      %23 = sbr.rel (%p21) target = $region8
    $region5: #{tpu_custom_call.1} parent=1 // loop_body
      %s25 = ssub.s32 %s20, 1
      %s26 = ssub.s32 %s20, 2
      %s33 = sadd.s32 1, %s28
      %p34 = scmp.ge.s32.totalorder %s33, 2
      %s35 = scalar_select %p34, 0, %s33
      %s36 = sadd.s32 1, %s27
      %s37 = scalar_select %p34, %s36, %s27
      %p38 = scmp.ge.s32.totalorder %s37, 2
      %s39 = scalar_select %p38, 0, %s37
      %s40 = ssub.s32 %s28, %s35
      %p41 = scmp.eq.s32.totalorder %s40, 0
      %s43 = sadd.s32 %s42, 1
      %s44 = scalar_select %p41, %s42, %s43
      %p47 = pneg %p41
      %p48 = scmp.eq.s32.totalorder %s20, 3
      %p49 = por %p47, %p48
      %p50 = scmp.ne.s32.totalorder %s42, %s45
      %p51 = scmp.eq.s32.totalorder %s20, 0
      %p52 = por %p50, %p51
      %p53 = scmp.ne.s32.totalorder %s42, %s45
      %p54 = scmp.eq.s32.totalorder %s25, 3
      %p55 = por %p53, %p54
      %p56 = scmp.ne.s32.totalorder %s45, %s46
      %p57 = scmp.eq.s32.totalorder %s25, 0
      %p58 = por %p56, %p57
      %p59 = scmp.ne.s32.totalorder %s45, %s46
      %p60 = scmp.eq.s32.totalorder %s26, 3
      %p61 = por %p59, %p60
      %p63 = scmp.ne.s32.totalorder %s46, %s62
      %p64 = scmp.eq.s32.totalorder %s26, 0
      %p65 = por %p63, %p64
      %s67 = sadd.s32 %s66, 1
      %p70 = scmp.eq.s32.totalorder %s20, 3
      %p71 = scmp.ne.s32.totalorder %s66, %s68
      %p72 = scmp.eq.s32.totalorder %s20, 0
      %p73 = por %p71, %p72
      %p74 = scmp.ne.s32.totalorder %s66, %s68
      %p75 = scmp.eq.s32.totalorder %s25, 3
      %p76 = por %p74, %p75
      %p77 = scmp.ne.s32.totalorder %s68, %s69
      %p78 = scmp.eq.s32.totalorder %s25, 0
      %p79 = por %p77, %p78
      %p80 = scmp.ne.s32.totalorder %s68, %s69
      %p81 = scmp.eq.s32.totalorder %s26, 3
      %p82 = por %p80, %p81
      %p84 = scmp.ne.s32.totalorder %s69, %s83
      %p85 = scmp.eq.s32.totalorder %s26, 0
      %p86 = por %p84, %p85
      %s88 = sadd.s32 %s87, 1
      %p91 = scmp.eq.s32.totalorder %s20, 3
      %p92 = scmp.ne.s32.totalorder %s87, %s89
      %p93 = scmp.eq.s32.totalorder %s20, 0
      %p94 = por %p92, %p93
      %p95 = scmp.ne.s32.totalorder %s87, %s89
      %p96 = scmp.eq.s32.totalorder %s25, 3
      %p97 = por %p95, %p96
      %p98 = scmp.ne.s32.totalorder %s89, %s90
      %p99 = scmp.eq.s32.totalorder %s25, 0
      %p100 = por %p98, %p99
      %p101 = scmp.ne.s32.totalorder %s89, %s90
      %p102 = scmp.eq.s32.totalorder %s26, 3
      %p103 = por %p101, %p102
      %p105 = scmp.ne.s32.totalorder %s90, %s104
      %p106 = scmp.eq.s32.totalorder %s26, 0
      %p107 = por %p105, %p106
      %s109 = sadd.s32 %s108, 1
      %p112 = scmp.eq.s32.totalorder %s20, 3
      %p113 = scmp.ne.s32.totalorder %s108, %s110
      %p114 = scmp.eq.s32.totalorder %s20, 0
      %p115 = por %p113, %p114
      %p116 = scmp.ne.s32.totalorder %s108, %s110
      %p117 = scmp.eq.s32.totalorder %s25, 3
      %p118 = por %p116, %p117
      %p119 = scmp.ne.s32.totalorder %s110, %s111
      %p120 = scmp.eq.s32.totalorder %s25, 0
      %p121 = por %p119, %p120
      %p122 = scmp.ne.s32.totalorder %s110, %s111
      %p123 = scmp.eq.s32.totalorder %s26, 3
      %p124 = por %p122, %p123
      %p126 = scmp.ne.s32.totalorder %s111, %s125
      %p127 = scmp.eq.s32.totalorder %s26, 0
      %p128 = por %p126, %p127
      %s130 = sadd.s32 %s129, 1
      %p133 = scmp.eq.s32.totalorder %s20, 3
      %p134 = scmp.ne.s32.totalorder %s129, %s131
      %p135 = scmp.eq.s32.totalorder %s20, 0
      %p136 = por %p134, %p135
      %p137 = scmp.ne.s32.totalorder %s129, %s131
      %p138 = scmp.eq.s32.totalorder %s25, 3
      %p139 = por %p137, %p138
      %p140 = scmp.ne.s32.totalorder %s131, %s132
      %p141 = scmp.eq.s32.totalorder %s25, 0
      %p142 = por %p140, %p141
      %p143 = scmp.ne.s32.totalorder %s131, %s132
      %p144 = scmp.eq.s32.totalorder %s26, 3
      %p145 = por %p143, %p144
      %p147 = scmp.ne.s32.totalorder %s132, %s146
      %p148 = scmp.eq.s32.totalorder %s26, 0
      %p149 = por %p147, %p148
      %s151 = sadd.s32 %s150, 1
      %p154 = scmp.eq.s32.totalorder %s20, 3
      %p155 = scmp.ne.s32.totalorder %s150, %s152
      %p156 = scmp.eq.s32.totalorder %s20, 0
      %p157 = por %p155, %p156
      %p158 = scmp.ne.s32.totalorder %s150, %s152
      %p159 = scmp.eq.s32.totalorder %s25, 3
      %p160 = por %p158, %p159
      %p161 = scmp.ne.s32.totalorder %s152, %s153
      %p162 = scmp.eq.s32.totalorder %s25, 0
      %p163 = por %p161, %p162
      %p164 = scmp.ne.s32.totalorder %s152, %s153
      %p165 = scmp.eq.s32.totalorder %s26, 3
      %p166 = por %p164, %p165
      %p168 = scmp.ne.s32.totalorder %s153, %s167
      %p169 = scmp.eq.s32.totalorder %s26, 0
      %p170 = por %p168, %p169
      %s171 = smul.u32 %s28, %s27
      %s172 = smul.u32 %s35, %s39
      %s173 = ssub.s32 %s171, %s172
      %p174 = scmp.eq.s32.totalorder %s173, 0
      %s176 = sadd.s32 %s175, 1
      %s177 = scalar_select %p174, %s175, %s176
      %p180 = pneg %p174
      %p181 = scmp.eq.s32.totalorder %s20, 3
      %p182 = por %p180, %p181
      %p183 = scmp.ne.s32.totalorder %s175, %s178
      %p184 = scmp.eq.s32.totalorder %s20, 0
      %p185 = por %p183, %p184
      %p186 = scmp.ne.s32.totalorder %s175, %s178
      %p187 = scmp.eq.s32.totalorder %s25, 3
      %p188 = por %p186, %p187
      %p189 = scmp.ne.s32.totalorder %s178, %s179
      %p190 = scmp.eq.s32.totalorder %s25, 0
      %p191 = por %p189, %p190
      %p192 = scmp.ne.s32.totalorder %s178, %s179
      %p193 = scmp.eq.s32.totalorder %s26, 3
      %p194 = por %p192, %p193
      %p196 = scmp.ne.s32.totalorder %s179, %s195
      %p197 = scmp.eq.s32.totalorder %s26, 0
      %p198 = por %p196, %p197
      %p199 = scmp.le.s32.totalorder 1, %s20
      %p200 = scmp.lt.s32.totalorder %s20, 5
      %p201 = pnand %p199, %p200
      %p202 = pneg %p201
      // Predicated region
      $region9: #{tpu_custom_call.1} parent=5 // pred_check
        _
      $region10: #{tpu_custom_call.1} parent=5 // pred_check_branch
        %204 = sbr.rel (%p201) target = $region12
      $region11: #{tpu_custom_call.1} parent=5 // pred_region
        %s205 = ssub.s32 %s20, 1
        // Predicated region
        $region13: #{tpu_custom_call.1} parent=11 // pred_check
          %p206 = pneg %p79
        $region14: #{tpu_custom_call.1} parent=11 // pred_check_branch
          %208 = sbr.rel (%p206) target = $region16
        $region15: #{tpu_custom_call.1} parent=11 // pred_region
          %210 = vsyncadd [#allocation8], 0
          %s211 = sshll.u32 %s1, 4
          %s212 = int_to_ptr.hbm [resolvable:$true] %s211
          %s213 = sshll.u32 [#allocation7], 4
          %s214 = int_to_ptr.vmem [resolvable:$true] %s213
          %219 = dma.hbm_to_vmem [thread:$0]  %s212, 4096, %s214, [#allocation8], 128, 128, 8
        $region16: #{tpu_custom_call.1} parent=11 // pred_fallthru
          _
        // Predicated region
        $region17: #{tpu_custom_call.1} parent=11 // pred_check
          %p220 = pneg %p100
        $region18: #{tpu_custom_call.1} parent=11 // pred_check_branch
          %222 = sbr.rel (%p220) target = $region20
        $region19: #{tpu_custom_call.1} parent=11 // pred_region
          %224 = vsyncadd [#allocation8], 0
          %s226 = sshll.u32 %s2, 4
          %s227 = int_to_ptr.hbm [resolvable:$true] %s226
          %s228 = sshll.u32 [#allocation9], 4
          %s229 = int_to_ptr.vmem [resolvable:$true] %s228
          %231 = dma.hbm_to_vmem [thread:$0]  %s227, 32, %s229, [#allocation8]
        $region20: #{tpu_custom_call.1} parent=11 // pred_fallthru
          _
        // Predicated region
        $region21: #{tpu_custom_call.1} parent=11 // pred_check
          %p232 = pneg %p121
        $region22: #{tpu_custom_call.1} parent=11 // pred_check_branch
          %234 = sbr.rel (%p232) target = $region24
        $region23: #{tpu_custom_call.1} parent=11 // pred_region
          _
        $region24: #{tpu_custom_call.1} parent=11 // pred_fallthru
          _
        // Predicated region
        $region25: #{tpu_custom_call.1} parent=11 // pred_check
          %p235 = pneg %p142
        $region26: #{tpu_custom_call.1} parent=11 // pred_check_branch
          %237 = sbr.rel (%p235) target = $region28
        $region27: #{tpu_custom_call.1} parent=11 // pred_region
          %239 = vsyncadd [#allocation11], 0
          %s240 = sshll.u32 %s4, 4
          %s241 = int_to_ptr.hbm [resolvable:$true] %s240
          %s242 = sshll.u32 [#allocation10], 4
          %s243 = int_to_ptr.vmem [resolvable:$true] %s242
          %248 = dma.hbm_to_vmem [thread:$0]  %s241, 2048, %s243, [#allocation11], 64, 64, 4
        $region28: #{tpu_custom_call.1} parent=11 // pred_fallthru
          _
        // Predicated region
        $region29: #{tpu_custom_call.1} parent=11 // pred_check
          %p249 = pneg %p163
        $region30: #{tpu_custom_call.1} parent=11 // pred_check_branch
          %251 = sbr.rel (%p249) target = $region32
        $region31: #{tpu_custom_call.1} parent=11 // pred_region
          _
        $region32: #{tpu_custom_call.1} parent=11 // pred_fallthru
          _
      $region12: #{tpu_custom_call.1} parent=5 // pred_fallthru
        _
      %p252 = scmp.lt.s32.totalorder %s20, 4
      // Predicated region
      $region33: #{tpu_custom_call.1} parent=5 // pred_check
        %p253 = pneg %p252
      $region34: #{tpu_custom_call.1} parent=5 // pred_check_branch
        %255 = sbr.rel (%p253) target = $region36
      $region35: #{tpu_custom_call.1} parent=5 // pred_region
        // Predicated region
        $region37: #{tpu_custom_call.1} parent=35 // pred_check
          %p256 = pneg %p52
        $region38: #{tpu_custom_call.1} parent=35 // pred_check_branch
          %258 = sbr.rel (%p256) target = $region40
        $region39: #{tpu_custom_call.1} parent=35 // pred_region
          %s259 = sand.u32 %s42, 1
          %s260 = scalar_lea.sflag [#allocation5], %s259
          %s261 = sand.u32 %s42, 1
          %s262 = smul.addr %s261, 128
          %s263 = scalar_lea.vmem [#allocation4], %s262
          %s264 = smul.u32 16, %s28
          %266 = vsyncadd %s260, 0
          %s267 = smul.addr %s264, 2
          %s268 = smul.addr %s267, 4
          %s269 = scalar_lea.hbm %s0, %s268
          %s270 = sshll.u32 %s269, 4
          %s271 = int_to_ptr.hbm [resolvable:$true] %s270
          %s272 = sshll.u32 %s263, 4
          %s273 = int_to_ptr.vmem [resolvable:$true] %s272
          %278 = dma.hbm_to_vmem [thread:$0]  %s271, 2048, %s273, %s260, 128, 128, 8
        $region40: #{tpu_custom_call.1} parent=35 // pred_fallthru
          _
      $region36: #{tpu_custom_call.1} parent=5 // pred_fallthru
        _
      %p279 = scmp.le.s32.totalorder 1, %s20
      %p280 = scmp.lt.s32.totalorder %s20, 5
      %p281 = pnand %p279, %p280
      %p282 = pneg %p281
      // Predicated region
      $region41: #{tpu_custom_call.1} parent=5 // pred_check
        _
      $region42: #{tpu_custom_call.1} parent=5 // pred_check_branch
        %284 = sbr.rel (%p281) target = $region44
      $region43: #{tpu_custom_call.1} parent=5 // pred_region
        %s285 = ssub.s32 %s20, 1
        %s286 = sand.u32 %s45, 1
        %s287 = scalar_lea.sflag [#allocation5], %s286
        %s288 = sand.u32 %s45, 1
        %s289 = smul.addr %s288, 128
        %s290 = scalar_lea.vmem [#allocation4], %s289
        // Predicated region
        $region45: #{tpu_custom_call.1} parent=43 // pred_check
          %p291 = pneg %p58
        $region46: #{tpu_custom_call.1} parent=43 // pred_check_branch
          %293 = sbr.rel (%p291) target = $region48
        $region47: #{tpu_custom_call.1} parent=43 // pred_region
          %295 = dma.done %s287, 2048
        $region48: #{tpu_custom_call.1} parent=43 // pred_fallthru
          _
        // Predicated region
        $region49: #{tpu_custom_call.1} parent=43 // pred_check
          %p296 = pneg %p79
        $region50: #{tpu_custom_call.1} parent=43 // pred_check_branch
          %298 = sbr.rel (%p296) target = $region52
        $region51: #{tpu_custom_call.1} parent=43 // pred_region
          %300 = dma.done [#allocation8], 4096
        $region52: #{tpu_custom_call.1} parent=43 // pred_fallthru
          _
        // Predicated region
        $region53: #{tpu_custom_call.1} parent=43 // pred_check
          %p301 = pneg %p100
        $region54: #{tpu_custom_call.1} parent=43 // pred_check_branch
          %303 = sbr.rel (%p301) target = $region56
        $region55: #{tpu_custom_call.1} parent=43 // pred_region
          %305 = dma.done [#allocation8], 32
        $region56: #{tpu_custom_call.1} parent=43 // pred_fallthru
          _
        // Predicated region
        $region57: #{tpu_custom_call.1} parent=43 // pred_check
          %p306 = pneg %p142
        $region58: #{tpu_custom_call.1} parent=43 // pred_check_branch
          %308 = sbr.rel (%p306) target = $region60
        $region59: #{tpu_custom_call.1} parent=43 // pred_region
          %310 = dma.done [#allocation11], 2048
        $region60: #{tpu_custom_call.1} parent=43 // pred_fallthru
          _
        %s311 = sand.u32 %s45, 1
        %s312 = scalar_lea.sflag [#allocation5], %s311
        %s313 = sand.u32 %s45, 1
        %s314 = smul.addr %s313, 128
        %s315 = scalar_lea.vmem [#allocation4], %s314
        %p316 = pneg %p58
        %p317 = pneg %p55
        %p318 = pneg %p79
        %p319 = pneg %p76
        %p320 = pneg %p100
        %p321 = pneg %p97
        %p322 = pneg %p121
        %p323 = pneg %p118
        %p324 = pneg %p142
        %p325 = pneg %p139
        %p326 = pneg %p163
        %p327 = pneg %p160
        %p328 = pneg %p191
        %p329 = pneg %p188
        %s330 = sand.u32 %s178, 1
        %s331 = scalar_lea.sflag [#allocation6], %s330
        %s332 = sand.u32 %s178, 1
        %s333 = smul.addr %s332, 128
        %s334 = scalar_lea.vmem [#allocation12], %s333
        %s335 = smul.u32 16, %s30
        %s336 = smul.u32 %s30, %s29
        %s337 = smul.u32 16, %s336
        %p338 = scmp.eq.s32.totalorder %s29, 0
        %p339 = scmp.eq.s32.totalorder %s30, 0
        %p340 = pnand %p338, %p339
        %p341 = pneg %p340
        // Predicated region
        $region61: #{tpu_custom_call.1} parent=43 // pred_check
          _
        $region62: #{tpu_custom_call.1} parent=43 // pred_check_branch
          %343 = sbr.rel (%p340) target = $region64
        $region63: #{tpu_custom_call.1} parent=43 // pred_region
          %v344 = vlaneseq
          %vm345 = vcmp.ge.s32.totalorder %v344, 0
          %vm346 = vcmp.lt.s32.totalorder %v344, 256
          %vm347 = vmand %vm345, %vm346
          %348 = vst.msk [vmem:[#allocation2] sm:$0x3] %vm347, 0.0
          %349 = vst.msk [vmem:[#allocation3] sm:$0x3] %vm347, 0.0
        $region64: #{tpu_custom_call.1} parent=43 // pred_fallthru
          _
        %v350 = vld [vmem:[%s290] sm:$0xff]
        %v351 = vld [vmem:[%s290 + $0x8] sm:$0xff]
        %v352 = vld [vmem:[%s290 + $0x10] sm:$0xff]
        %v353 = vld [vmem:[%s290 + $0x18] sm:$0xff]
        %v354 = vld [vmem:[%s290 + $0x20] sm:$0xff]
        %v355 = vld [vmem:[%s290 + $0x28] sm:$0xff]
        %v356 = vld [vmem:[%s290 + $0x30] sm:$0xff]
        %v357 = vld [vmem:[%s290 + $0x38] sm:$0xff]
        %v358 = vld [vmem:[%s290 + $0x40] sm:$0xff]
        %v359 = vld [vmem:[%s290 + $0x48] sm:$0xff]
        %v360 = vld [vmem:[%s290 + $0x50] sm:$0xff]
        %v361 = vld [vmem:[%s290 + $0x58] sm:$0xff]
        %v362 = vld [vmem:[%s290 + $0x60] sm:$0xff]
        %v363 = vld [vmem:[%s290 + $0x68] sm:$0xff]
        %v364 = vld [vmem:[%s290 + $0x70] sm:$0xff]
        %v365 = vld [vmem:[%s290 + $0x78] sm:$0xff]
        %v366 = vld [vmem:[#allocation7] sm:$0xff]
        %v367 = vld [vmem:[#allocation7 + $0x8] sm:$0xff]
        %v368 = vld [vmem:[#allocation7 + $0x10] sm:$0xff]
        %v369 = vld [vmem:[#allocation7 + $0x18] sm:$0xff]
        %v370 = vld [vmem:[#allocation7 + $0x20] sm:$0xff]
        %v371 = vld [vmem:[#allocation7 + $0x28] sm:$0xff]
        %v372 = vld [vmem:[#allocation7 + $0x30] sm:$0xff]
        %v373 = vld [vmem:[#allocation7 + $0x38] sm:$0xff]
        %v374 = vld [vmem:[#allocation7 + $0x40] sm:$0xff]
        %v375 = vld [vmem:[#allocation7 + $0x48] sm:$0xff]
        %v376 = vld [vmem:[#allocation7 + $0x50] sm:$0xff]
        %v377 = vld [vmem:[#allocation7 + $0x58] sm:$0xff]
        %v378 = vld [vmem:[#allocation7 + $0x60] sm:$0xff]
        %v379 = vld [vmem:[#allocation7 + $0x68] sm:$0xff]
        %v380 = vld [vmem:[#allocation7 + $0x70] sm:$0xff]
        %v381 = vld [vmem:[#allocation7 + $0x78] sm:$0xff]
        %v382 = vld [vmem:[#allocation7 + $0x80] sm:$0xff]
        %v383 = vld [vmem:[#allocation7 + $0x88] sm:$0xff]
        %v384 = vld [vmem:[#allocation7 + $0x90] sm:$0xff]
        %v385 = vld [vmem:[#allocation7 + $0x98] sm:$0xff]
        %v386 = vld [vmem:[#allocation7 + $0xa0] sm:$0xff]
        %v387 = vld [vmem:[#allocation7 + $0xa8] sm:$0xff]
        %v388 = vld [vmem:[#allocation7 + $0xb0] sm:$0xff]
        %v389 = vld [vmem:[#allocation7 + $0xb8] sm:$0xff]
        %v390 = vld [vmem:[#allocation7 + $0xc0] sm:$0xff]
        %v391 = vld [vmem:[#allocation7 + $0xc8] sm:$0xff]
        %v392 = vld [vmem:[#allocation7 + $0xd0] sm:$0xff]
        %v393 = vld [vmem:[#allocation7 + $0xd8] sm:$0xff]
        %v394 = vld [vmem:[#allocation7 + $0xe0] sm:$0xff]
        %v395 = vld [vmem:[#allocation7 + $0xe8] sm:$0xff]
        %v396 = vld [vmem:[#allocation7 + $0xf0] sm:$0xff]
        %v397 = vld [vmem:[#allocation7 + $0xf8] sm:$0xff]
        %v414 = vunpack.c.l.b16 %v350
        %v415 = vunpack.c.h.b16 %v350
        %v416 = vunpack.c.l.b16 %v351
        %v417 = vunpack.c.h.b16 %v351
        %v418 = vunpack.c.l.b16 %v352
        %v419 = vunpack.c.h.b16 %v352
        %v420 = vunpack.c.l.b16 %v353
        %v421 = vunpack.c.h.b16 %v353
        %v422 = vunpack.c.l.b16 %v354
        %v423 = vunpack.c.h.b16 %v354
        %v424 = vunpack.c.l.b16 %v355
        %v425 = vunpack.c.h.b16 %v355
        %v426 = vunpack.c.l.b16 %v356
        %v427 = vunpack.c.h.b16 %v356
        %v428 = vunpack.c.l.b16 %v357
        %v429 = vunpack.c.h.b16 %v357
        %v430 = vunpack.c.l.b16 %v358
        %v431 = vunpack.c.h.b16 %v358
        %v432 = vunpack.c.l.b16 %v359
        %v433 = vunpack.c.h.b16 %v359
        %v434 = vunpack.c.l.b16 %v360
        %v435 = vunpack.c.h.b16 %v360
        %v436 = vunpack.c.l.b16 %v361
        %v437 = vunpack.c.h.b16 %v361
        %v438 = vunpack.c.l.b16 %v362
        %v439 = vunpack.c.h.b16 %v362
        %v440 = vunpack.c.l.b16 %v363
        %v441 = vunpack.c.h.b16 %v363
        %v442 = vunpack.c.l.b16 %v364
        %v443 = vunpack.c.h.b16 %v364
        %v444 = vunpack.c.l.b16 %v365
        %v445 = vunpack.c.h.b16 %v365
        %v446 = vpack.c.b16 %v416, %v414
        %v447 = vpack.c.b16 %v417, %v415
        %v448 = vpack.c.b16 %v420, %v418
        %v449 = vpack.c.b16 %v421, %v419
        %v450 = vpack.c.b16 %v424, %v422
        %v451 = vpack.c.b16 %v425, %v423
        %v452 = vpack.c.b16 %v428, %v426
        %v453 = vpack.c.b16 %v429, %v427
        %v454 = vpack.c.b16 %v432, %v430
        %v455 = vpack.c.b16 %v433, %v431
        %v456 = vpack.c.b16 %v436, %v434
        %v457 = vpack.c.b16 %v437, %v435
        %v458 = vpack.c.b16 %v440, %v438
        %v459 = vpack.c.b16 %v441, %v439
        %v460 = vpack.c.b16 %v444, %v442
        %v461 = vpack.c.b16 %v445, %v443
        %v510 = vunpack.c.l.b16 %v366
        %v511 = vunpack.c.h.b16 %v366
        %v512 = vunpack.c.l.b16 %v367
        %v513 = vunpack.c.h.b16 %v367
        %v514 = vunpack.c.l.b16 %v368
        %v515 = vunpack.c.h.b16 %v368
        %v516 = vunpack.c.l.b16 %v369
        %v517 = vunpack.c.h.b16 %v369
        %v518 = vunpack.c.l.b16 %v370
        %v519 = vunpack.c.h.b16 %v370
        %v520 = vunpack.c.l.b16 %v371
        %v521 = vunpack.c.h.b16 %v371
        %v522 = vunpack.c.l.b16 %v372
        %v523 = vunpack.c.h.b16 %v372
        %v524 = vunpack.c.l.b16 %v373
        %v525 = vunpack.c.h.b16 %v373
        %v526 = vunpack.c.l.b16 %v374
        %v527 = vunpack.c.h.b16 %v374
        %v528 = vunpack.c.l.b16 %v375
        %v529 = vunpack.c.h.b16 %v375
        %v530 = vunpack.c.l.b16 %v376
        %v531 = vunpack.c.h.b16 %v376
        %v532 = vunpack.c.l.b16 %v377
        %v533 = vunpack.c.h.b16 %v377
        %v534 = vunpack.c.l.b16 %v378
        %v535 = vunpack.c.h.b16 %v378
        %v536 = vunpack.c.l.b16 %v379
        %v537 = vunpack.c.h.b16 %v379
        %v538 = vunpack.c.l.b16 %v380
        %v539 = vunpack.c.h.b16 %v380
        %v540 = vunpack.c.l.b16 %v381
        %v541 = vunpack.c.h.b16 %v381
        %v542 = vunpack.c.l.b16 %v382
        %v543 = vunpack.c.h.b16 %v382
        %v544 = vunpack.c.l.b16 %v383
        %v545 = vunpack.c.h.b16 %v383
        %v546 = vunpack.c.l.b16 %v384
        %v547 = vunpack.c.h.b16 %v384
        %v548 = vunpack.c.l.b16 %v385
        %v549 = vunpack.c.h.b16 %v385
        %v550 = vunpack.c.l.b16 %v386
        %v551 = vunpack.c.h.b16 %v386
        %v552 = vunpack.c.l.b16 %v387
        %v553 = vunpack.c.h.b16 %v387
        %v554 = vunpack.c.l.b16 %v388
        %v555 = vunpack.c.h.b16 %v388
        %v556 = vunpack.c.l.b16 %v389
        %v557 = vunpack.c.h.b16 %v389
        %v558 = vunpack.c.l.b16 %v390
        %v559 = vunpack.c.h.b16 %v390
        %v560 = vunpack.c.l.b16 %v391
        %v561 = vunpack.c.h.b16 %v391
        %v562 = vunpack.c.l.b16 %v392
        %v563 = vunpack.c.h.b16 %v392
        %v564 = vunpack.c.l.b16 %v393
        %v565 = vunpack.c.h.b16 %v393
        %v566 = vunpack.c.l.b16 %v394
        %v567 = vunpack.c.h.b16 %v394
        %v568 = vunpack.c.l.b16 %v395
        %v569 = vunpack.c.h.b16 %v395
        %v570 = vunpack.c.l.b16 %v396
        %v571 = vunpack.c.h.b16 %v396
        %v572 = vunpack.c.l.b16 %v397
        %v573 = vunpack.c.h.b16 %v397
        %v574 = vpack.c.b16 %v512, %v510
        %v575 = vpack.c.b16 %v513, %v511
        %v576 = vpack.c.b16 %v516, %v514
        %v577 = vpack.c.b16 %v517, %v515
        %v578 = vpack.c.b16 %v520, %v518
        %v579 = vpack.c.b16 %v521, %v519
        %v580 = vpack.c.b16 %v524, %v522
        %v581 = vpack.c.b16 %v525, %v523
        %v582 = vpack.c.b16 %v528, %v526
        %v583 = vpack.c.b16 %v529, %v527
        %v584 = vpack.c.b16 %v532, %v530
        %v585 = vpack.c.b16 %v533, %v531
        %v586 = vpack.c.b16 %v536, %v534
        %v587 = vpack.c.b16 %v537, %v535
        %v588 = vpack.c.b16 %v540, %v538
        %v589 = vpack.c.b16 %v541, %v539
        %v590 = vpack.c.b16 %v544, %v542
        %v591 = vpack.c.b16 %v545, %v543
        %v592 = vpack.c.b16 %v548, %v546
        %v593 = vpack.c.b16 %v549, %v547
        %v594 = vpack.c.b16 %v552, %v550
        %v595 = vpack.c.b16 %v553, %v551
        %v596 = vpack.c.b16 %v556, %v554
        %v597 = vpack.c.b16 %v557, %v555
        %v598 = vpack.c.b16 %v560, %v558
        %v599 = vpack.c.b16 %v561, %v559
        %v600 = vpack.c.b16 %v564, %v562
        %v601 = vpack.c.b16 %v565, %v563
        %v602 = vpack.c.b16 %v568, %v566
        %v603 = vpack.c.b16 %v569, %v567
        %v604 = vpack.c.b16 %v572, %v570
        %v605 = vpack.c.b16 %v573, %v571
        %638 = vmatpush.bf16.msra.mxu0 %v588
        %639 = vmatpush.bf16.msra.mxu0 %v586
        %640 = vmatpush.bf16.msra.mxu0 %v584
        %641 = vmatpush.bf16.msra.mxu0 %v582
        %642 = vmatpush.bf16.msra.mxu0 %v580
        %643 = vmatpush.bf16.msra.mxu0 %v578
        %644 = vmatpush.bf16.msra.mxu0 %v576
        %645 = vmatpush.bf16.msra.mxu0 %v574
        %646 = vmatmul.bf16.gmra.mxu0 %v446
        %v647 = vpop.f32.mrf.mxu0
        %v648 = vadd.f32 0.0, %v647
        %v649 = vpop.f32.mrf.mxu0
        %v650 = vadd.f32 0.0, %v649
        %651 = vmatmul.bf16.gmra.mxu0 %v448
        %v652 = vpop.f32.mrf.mxu0
        %v653 = vadd.f32 0.0, %v652
        %v654 = vpop.f32.mrf.mxu0
        %v655 = vadd.f32 0.0, %v654
        %656 = vmatmul.bf16.gmra.mxu0 %v450
        %v657 = vpop.f32.mrf.mxu0
        %v658 = vadd.f32 0.0, %v657
        %v659 = vpop.f32.mrf.mxu0
        %v660 = vadd.f32 0.0, %v659
        %661 = vmatmul.bf16.gmra.mxu0 %v452
        %v662 = vpop.f32.mrf.mxu0
        %v663 = vadd.f32 0.0, %v662
        %v664 = vpop.f32.mrf.mxu0
        %v665 = vadd.f32 0.0, %v664
        %666 = vmatmul.bf16.gmra.mxu0 %v454
        %v667 = vpop.f32.mrf.mxu0
        %v668 = vadd.f32 0.0, %v667
        %v669 = vpop.f32.mrf.mxu0
        %v670 = vadd.f32 0.0, %v669
        %671 = vmatmul.bf16.gmra.mxu0 %v456
        %v672 = vpop.f32.mrf.mxu0
        %v673 = vadd.f32 0.0, %v672
        %v674 = vpop.f32.mrf.mxu0
        %v675 = vadd.f32 0.0, %v674
        %676 = vmatmul.bf16.gmra.mxu0 %v458
        %v677 = vpop.f32.mrf.mxu0
        %v678 = vadd.f32 0.0, %v677
        %v679 = vpop.f32.mrf.mxu0
        %v680 = vadd.f32 0.0, %v679
        %681 = vmatmul.bf16.gmra.mxu0 %v460
        %v682 = vpop.f32.mrf.mxu0
        %v683 = vadd.f32 0.0, %v682
        %v684 = vpop.f32.mrf.mxu0
        %v685 = vadd.f32 0.0, %v684
        %686 = vdwg.mxu0
        %687 = vmatpush.bf16.msra.mxu0 %v604
        %688 = vmatpush.bf16.msra.mxu0 %v602
        %689 = vmatpush.bf16.msra.mxu0 %v600
        %690 = vmatpush.bf16.msra.mxu0 %v598
        %691 = vmatpush.bf16.msra.mxu0 %v596
        %692 = vmatpush.bf16.msra.mxu0 %v594
        %693 = vmatpush.bf16.msra.mxu0 %v592
        %694 = vmatpush.bf16.msra.mxu0 %v590
        %695 = vmatmul.bf16.gmra.mxu0 %v447
        %v696 = vpop.f32.mrf.mxu0
        %v697 = vadd.f32 %v648, %v696
        %v698 = vpop.f32.mrf.mxu0
        %v699 = vadd.f32 %v650, %v698
        %700 = vmatmul.bf16.gmra.mxu0 %v449
        %v701 = vpop.f32.mrf.mxu0
        %v702 = vadd.f32 %v653, %v701
        %v703 = vpop.f32.mrf.mxu0
        %v704 = vadd.f32 %v655, %v703
        %705 = vmatmul.bf16.gmra.mxu0 %v451
        %v706 = vpop.f32.mrf.mxu0
        %v707 = vadd.f32 %v658, %v706
        %v708 = vpop.f32.mrf.mxu0
        %v709 = vadd.f32 %v660, %v708
        %710 = vmatmul.bf16.gmra.mxu0 %v453
        %v711 = vpop.f32.mrf.mxu0
        %v712 = vadd.f32 %v663, %v711
        %v713 = vpop.f32.mrf.mxu0
        %v714 = vadd.f32 %v665, %v713
        %715 = vmatmul.bf16.gmra.mxu0 %v455
        %v716 = vpop.f32.mrf.mxu0
        %v717 = vadd.f32 %v668, %v716
        %v718 = vpop.f32.mrf.mxu0
        %v719 = vadd.f32 %v670, %v718
        %720 = vmatmul.bf16.gmra.mxu0 %v457
        %v721 = vpop.f32.mrf.mxu0
        %v722 = vadd.f32 %v673, %v721
        %v723 = vpop.f32.mrf.mxu0
        %v724 = vadd.f32 %v675, %v723
        %725 = vmatmul.bf16.gmra.mxu0 %v459
        %v726 = vpop.f32.mrf.mxu0
        %v727 = vadd.f32 %v678, %v726
        %v728 = vpop.f32.mrf.mxu0
        %v729 = vadd.f32 %v680, %v728
        %730 = vmatmul.bf16.gmra.mxu0 %v461
        %v731 = vpop.f32.mrf.mxu0
        %v732 = vadd.f32 %v683, %v731
        %v733 = vpop.f32.mrf.mxu0
        %v734 = vadd.f32 %v685, %v733
        %735 = vdwg.mxu0
        %736 = vmatpush.bf16.msra.mxu0 %v589
        %737 = vmatpush.bf16.msra.mxu0 %v587
        %738 = vmatpush.bf16.msra.mxu0 %v585
        %739 = vmatpush.bf16.msra.mxu0 %v583
        %740 = vmatpush.bf16.msra.mxu0 %v581
        %741 = vmatpush.bf16.msra.mxu0 %v579
        %742 = vmatpush.bf16.msra.mxu0 %v577
        %743 = vmatpush.bf16.msra.mxu0 %v575
        %744 = vmatmul.bf16.gmra.mxu0 %v446
        %v745 = vpop.f32.mrf.mxu0
        %v746 = vadd.f32 0.0, %v745
        %v747 = vpop.f32.mrf.mxu0
        %v748 = vadd.f32 0.0, %v747
        %749 = vmatmul.bf16.gmra.mxu0 %v448
        %v750 = vpop.f32.mrf.mxu0
        %v751 = vadd.f32 0.0, %v750
        %v752 = vpop.f32.mrf.mxu0
        %v753 = vadd.f32 0.0, %v752
        %754 = vmatmul.bf16.gmra.mxu0 %v450
        %v755 = vpop.f32.mrf.mxu0
        %v756 = vadd.f32 0.0, %v755
        %v757 = vpop.f32.mrf.mxu0
        %v758 = vadd.f32 0.0, %v757
        %759 = vmatmul.bf16.gmra.mxu0 %v452
        %v760 = vpop.f32.mrf.mxu0
        %v761 = vadd.f32 0.0, %v760
        %v762 = vpop.f32.mrf.mxu0
        %v763 = vadd.f32 0.0, %v762
        %764 = vmatmul.bf16.gmra.mxu0 %v454
        %v765 = vpop.f32.mrf.mxu0
        %v766 = vadd.f32 0.0, %v765
        %v767 = vpop.f32.mrf.mxu0
        %v768 = vadd.f32 0.0, %v767
        %769 = vmatmul.bf16.gmra.mxu0 %v456
        %v770 = vpop.f32.mrf.mxu0
        %v771 = vadd.f32 0.0, %v770
        %v772 = vpop.f32.mrf.mxu0
        %v773 = vadd.f32 0.0, %v772
        %774 = vmatmul.bf16.gmra.mxu0 %v458
        %v775 = vpop.f32.mrf.mxu0
        %v776 = vadd.f32 0.0, %v775
        %v777 = vpop.f32.mrf.mxu0
        %v778 = vadd.f32 0.0, %v777
        %779 = vmatmul.bf16.gmra.mxu0 %v460
        %v780 = vpop.f32.mrf.mxu0
        %v781 = vadd.f32 0.0, %v780
        %v782 = vpop.f32.mrf.mxu0
        %v783 = vadd.f32 0.0, %v782
        %784 = vdwg.mxu0
        %785 = vmatpush.bf16.msra.mxu0 %v605
        %786 = vmatpush.bf16.msra.mxu0 %v603
        %787 = vmatpush.bf16.msra.mxu0 %v601
        %788 = vmatpush.bf16.msra.mxu0 %v599
        %789 = vmatpush.bf16.msra.mxu0 %v597
        %790 = vmatpush.bf16.msra.mxu0 %v595
        %791 = vmatpush.bf16.msra.mxu0 %v593
        %792 = vmatpush.bf16.msra.mxu0 %v591
        %793 = vmatmul.bf16.gmra.mxu0 %v447
        %v794 = vpop.f32.mrf.mxu0
        %v795 = vadd.f32 %v746, %v794
        %v796 = vpop.f32.mrf.mxu0
        %v797 = vadd.f32 %v748, %v796
        %798 = vmatmul.bf16.gmra.mxu0 %v449
        %v799 = vpop.f32.mrf.mxu0
        %v800 = vadd.f32 %v751, %v799
        %v801 = vpop.f32.mrf.mxu0
        %v802 = vadd.f32 %v753, %v801
        %803 = vmatmul.bf16.gmra.mxu0 %v451
        %v804 = vpop.f32.mrf.mxu0
        %v805 = vadd.f32 %v756, %v804
        %v806 = vpop.f32.mrf.mxu0
        %v807 = vadd.f32 %v758, %v806
        %808 = vmatmul.bf16.gmra.mxu0 %v453
        %v809 = vpop.f32.mrf.mxu0
        %v810 = vadd.f32 %v761, %v809
        %v811 = vpop.f32.mrf.mxu0
        %v812 = vadd.f32 %v763, %v811
        %813 = vmatmul.bf16.gmra.mxu0 %v455
        %v814 = vpop.f32.mrf.mxu0
        %v815 = vadd.f32 %v766, %v814
        %v816 = vpop.f32.mrf.mxu0
        %v817 = vadd.f32 %v768, %v816
        %818 = vmatmul.bf16.gmra.mxu0 %v457
        %v819 = vpop.f32.mrf.mxu0
        %v820 = vadd.f32 %v771, %v819
        %v821 = vpop.f32.mrf.mxu0
        %v822 = vadd.f32 %v773, %v821
        %823 = vmatmul.bf16.gmra.mxu0 %v459
        %v824 = vpop.f32.mrf.mxu0
        %v825 = vadd.f32 %v776, %v824
        %v826 = vpop.f32.mrf.mxu0
        %v827 = vadd.f32 %v778, %v826
        %828 = vmatmul.bf16.gmra.mxu0 %v461
        %v829 = vpop.f32.mrf.mxu0
        %v830 = vadd.f32 %v781, %v829
        %v831 = vpop.f32.mrf.mxu0
        %v832 = vadd.f32 %v783, %v831
        %833 = vdwg.mxu0
        // Predicated region
        $region65: #{tpu_custom_call.1} parent=43 // pred_check
          %p834 = pneg %p338
        $region66: #{tpu_custom_call.1} parent=43 // pred_check_branch
          %836 = sbr.rel (%p834) target = $region68
        $region67: #{tpu_custom_call.1} parent=43 // pred_region
          %v837 = vld [vmem:[#allocation2] sm:$0x3]
          %v838 = vadd.f32 %v697, %v699
          %v839 = vadd.f32 %v838, %v702
          %v840 = vadd.f32 %v839, %v704
          %v841 = vadd.f32 %v840, %v707
          %v842 = vadd.f32 %v841, %v709
          %v843 = vadd.f32 %v842, %v712
          %v844 = vadd.f32 %v843, %v714
          %v845 = vadd.f32 %v844, %v717
          %v846 = vadd.f32 %v845, %v719
          %v847 = vadd.f32 %v846, %v722
          %v848 = vadd.f32 %v847, %v724
          %v849 = vadd.f32 %v848, %v727
          %v850 = vadd.f32 %v849, %v729
          %v851 = vadd.f32 %v850, %v732
          %v852 = vadd.f32 %v851, %v734
          %v853 = vrot.slane %v852, 4
          %v854 = vadd.f32 %v852, %v853
          %v855 = vrot.slane %v854, 2
          %v856 = vadd.f32 %v854, %v855
          %v857 = vrot.slane %v856, 1
          %v858 = vadd.f32 %v856, %v857
          %v859 = vadd.f32 %v795, %v797
          %v860 = vadd.f32 %v859, %v800
          %v861 = vadd.f32 %v860, %v802
          %v862 = vadd.f32 %v861, %v805
          %v863 = vadd.f32 %v862, %v807
          %v864 = vadd.f32 %v863, %v810
          %v865 = vadd.f32 %v864, %v812
          %v866 = vadd.f32 %v865, %v815
          %v867 = vadd.f32 %v866, %v817
          %v868 = vadd.f32 %v867, %v820
          %v869 = vadd.f32 %v868, %v822
          %v870 = vadd.f32 %v869, %v825
          %v871 = vadd.f32 %v870, %v827
          %v872 = vadd.f32 %v871, %v830
          %v873 = vadd.f32 %v872, %v832
          %v874 = vrot.slane %v873, 4
          %v875 = vadd.f32 %v873, %v874
          %v876 = vrot.slane %v875, 2
          %v877 = vadd.f32 %v875, %v876
          %v878 = vrot.slane %v877, 1
          %v879 = vadd.f32 %v877, %v878
          %v882 = vrot.slane %v879, 7
          %vm883 = vcmask 1040384
          %v884 = vsel %vm883, %v858, %v882
          %v886 = vadd.f32 %v837, %v884
          %v887 = vlaneseq
          %vm888 = vcmp.ge.s32.totalorder %v887, 0
          %vm889 = vcmp.lt.s32.totalorder %v887, 256
          %vm890 = vmand %vm888, %vm889
          %891 = vst.msk [vmem:[#allocation2] sm:$0x3] %vm890, %v886
          %v892 = vld [vmem:[#allocation3] sm:$0x3]
          %v893 = vmul.f32 %v697, %v697
          %v894 = vmul.f32 %v795, %v795
          %v895 = vmul.f32 %v699, %v699
          %v896 = vmul.f32 %v797, %v797
          %v897 = vmul.f32 %v702, %v702
          %v898 = vmul.f32 %v800, %v800
          %v899 = vmul.f32 %v704, %v704
          %v900 = vmul.f32 %v802, %v802
          %v901 = vmul.f32 %v707, %v707
          %v902 = vmul.f32 %v805, %v805
          %v903 = vmul.f32 %v709, %v709
          %v904 = vmul.f32 %v807, %v807
          %v905 = vmul.f32 %v712, %v712
          %v906 = vmul.f32 %v810, %v810
          %v907 = vmul.f32 %v714, %v714
          %v908 = vmul.f32 %v812, %v812
          %v909 = vmul.f32 %v717, %v717
          %v910 = vmul.f32 %v815, %v815
          %v911 = vmul.f32 %v719, %v719
          %v912 = vmul.f32 %v817, %v817
          %v913 = vmul.f32 %v722, %v722
          %v914 = vmul.f32 %v820, %v820
          %v915 = vmul.f32 %v724, %v724
          %v916 = vmul.f32 %v822, %v822
          %v917 = vmul.f32 %v727, %v727
          %v918 = vmul.f32 %v825, %v825
          %v919 = vmul.f32 %v729, %v729
          %v920 = vmul.f32 %v827, %v827
          %v921 = vmul.f32 %v732, %v732
          %v922 = vmul.f32 %v830, %v830
          %v923 = vmul.f32 %v734, %v734
          %v924 = vmul.f32 %v832, %v832
          %v925 = vadd.f32 %v893, %v895
          %v926 = vadd.f32 %v925, %v897
          %v927 = vadd.f32 %v926, %v899
          %v928 = vadd.f32 %v927, %v901
          %v929 = vadd.f32 %v928, %v903
          %v930 = vadd.f32 %v929, %v905
          %v931 = vadd.f32 %v930, %v907
          %v932 = vadd.f32 %v931, %v909
          %v933 = vadd.f32 %v932, %v911
          %v934 = vadd.f32 %v933, %v913
          %v935 = vadd.f32 %v934, %v915
          %v936 = vadd.f32 %v935, %v917
          %v937 = vadd.f32 %v936, %v919
          %v938 = vadd.f32 %v937, %v921
          %v939 = vadd.f32 %v938, %v923
          %v940 = vrot.slane %v939, 4
          %v941 = vadd.f32 %v939, %v940
          %v942 = vrot.slane %v941, 2
          %v943 = vadd.f32 %v941, %v942
          %v944 = vrot.slane %v943, 1
          %v945 = vadd.f32 %v943, %v944
          %v946 = vadd.f32 %v894, %v896
          %v947 = vadd.f32 %v946, %v898
          %v948 = vadd.f32 %v947, %v900
          %v949 = vadd.f32 %v948, %v902
          %v950 = vadd.f32 %v949, %v904
          %v951 = vadd.f32 %v950, %v906
          %v952 = vadd.f32 %v951, %v908
          %v953 = vadd.f32 %v952, %v910
          %v954 = vadd.f32 %v953, %v912
          %v955 = vadd.f32 %v954, %v914
          %v956 = vadd.f32 %v955, %v916
          %v957 = vadd.f32 %v956, %v918
          %v958 = vadd.f32 %v957, %v920
          %v959 = vadd.f32 %v958, %v922
          %v960 = vadd.f32 %v959, %v924
          %v961 = vrot.slane %v960, 4
          %v962 = vadd.f32 %v960, %v961
          %v963 = vrot.slane %v962, 2
          %v964 = vadd.f32 %v962, %v963
          %v965 = vrot.slane %v964, 1
          %v966 = vadd.f32 %v964, %v965
          %v969 = vrot.slane %v966, 7
          %v970 = vsel %vm883, %v945, %v969
          %v972 = vadd.f32 %v892, %v970
          %973 = vst.msk [vmem:[#allocation3] sm:$0x3] %vm890, %v972
        $region68: #{tpu_custom_call.1} parent=43 // pred_fallthru
          _
        %p974 = scmp.eq.s32.totalorder %s29, 1
        // Predicated region
        $region69: #{tpu_custom_call.1} parent=43 // pred_check
          %p975 = pneg %p974
        $region70: #{tpu_custom_call.1} parent=43 // pred_check_branch
          %977 = sbr.rel (%p975) target = $region72
        $region71: #{tpu_custom_call.1} parent=43 // pred_region
          // Predicated region
          $region73: #{tpu_custom_call.1} parent=71 // pred_check
            %p978 = pneg %p339
          $region74: #{tpu_custom_call.1} parent=71 // pred_check_branch
            %980 = sbr.rel (%p978) target = $region76
          $region75: #{tpu_custom_call.1} parent=71 // pred_region
            %v981 = vld [vmem:[#allocation2] sm:$0x3]
            %v982 = vmul.f32 %v981, 0.00390625
            %v983 = vld [vmem:[#allocation3] sm:$0x3]
            %v984 = vmul.f32 %v983, 0.00390625
            %v985 = vmul.f32 %v982, %v982
            %v986 = vsub.f32 %v984, %v985
            %v987 = vmax.f32 %v986, 0.0
            %v988 = vld [vmem:[#allocation9] sm:$0x3]
            %v989 = vadd.f32 %v987, 1e-05
            %v990 = vrsqrt.pop %v989
            %v991 = vmul.f32 %v990, %v989
            %v992 = vmul.f32 %v991, %v990
            %v993 = vmul.f32 0.5, %v992
            %v994 = vsub.f32 1.5, %v993
            %v995 = vmul.f32 %v990, %v994
            %vm996 = vweird.f32 %v989
            %vm997 = vweird.f32 %v990
            %vm998 = vmor %vm996, %vm997
            %v999 = vsel %vm998, %v990, %v995
            %v1000 = vmul.f32 %v988, %v999
            %v1001 = vlaneseq
            %vm1002 = vcmp.ge.s32.totalorder %v1001, 0
            %vm1003 = vcmp.lt.s32.totalorder %v1001, 256
            %vm1004 = vmand %vm1002, %vm1003
            %1005 = vst.msk [vmem:[#allocation3] sm:$0x3] %vm1004, %v1000
            %v1006 = vld [vmem:[%s3] sm:$0x3]
            %v1007 = vmul.f32 %v982, %v1000
            %v1008 = vsub.f32 %v1006, %v1007
            %1009 = vst.msk [vmem:[#allocation2] sm:$0x3] %vm1004, %v1008
          $region76: #{tpu_custom_call.1} parent=71 // pred_fallthru
            _
          %v1010 = vld [vmem:[#allocation3] sm:$0x3]
          %v1012 = vperm.slane %v1010, 0
          %v1013 = vperm.slane %v1010, 1
          %v1016 = vmul.f32 %v697, %v1012
          %v1017 = vmul.f32 %v795, %v1013
          %v1018 = vmul.f32 %v699, %v1012
          %v1019 = vmul.f32 %v797, %v1013
          %v1020 = vmul.f32 %v702, %v1012
          %v1021 = vmul.f32 %v800, %v1013
          %v1022 = vmul.f32 %v704, %v1012
          %v1023 = vmul.f32 %v802, %v1013
          %v1024 = vmul.f32 %v707, %v1012
          %v1025 = vmul.f32 %v805, %v1013
          %v1026 = vmul.f32 %v709, %v1012
          %v1027 = vmul.f32 %v807, %v1013
          %v1028 = vmul.f32 %v712, %v1012
          %v1029 = vmul.f32 %v810, %v1013
          %v1030 = vmul.f32 %v714, %v1012
          %v1031 = vmul.f32 %v812, %v1013
          %v1032 = vmul.f32 %v717, %v1012
          %v1033 = vmul.f32 %v815, %v1013
          %v1034 = vmul.f32 %v719, %v1012
          %v1035 = vmul.f32 %v817, %v1013
          %v1036 = vmul.f32 %v722, %v1012
          %v1037 = vmul.f32 %v820, %v1013
          %v1038 = vmul.f32 %v724, %v1012
          %v1039 = vmul.f32 %v822, %v1013
          %v1040 = vmul.f32 %v727, %v1012
          %v1041 = vmul.f32 %v825, %v1013
          %v1042 = vmul.f32 %v729, %v1012
          %v1043 = vmul.f32 %v827, %v1013
          %v1044 = vmul.f32 %v732, %v1012
          %v1045 = vmul.f32 %v830, %v1013
          %v1046 = vmul.f32 %v734, %v1012
          %v1047 = vmul.f32 %v832, %v1013
          %v1048 = vld [vmem:[#allocation2] sm:$0x3]
          %v1050 = vperm.slane %v1048, 0
          %v1051 = vperm.slane %v1048, 1
          %v1054 = vadd.f32 %v1016, %v1050
          %v1055 = vadd.f32 %v1017, %v1051
          %v1056 = vadd.f32 %v1018, %v1050
          %v1057 = vadd.f32 %v1019, %v1051
          %v1058 = vadd.f32 %v1020, %v1050
          %v1059 = vadd.f32 %v1021, %v1051
          %v1060 = vadd.f32 %v1022, %v1050
          %v1061 = vadd.f32 %v1023, %v1051
          %v1062 = vadd.f32 %v1024, %v1050
          %v1063 = vadd.f32 %v1025, %v1051
          %v1064 = vadd.f32 %v1026, %v1050
          %v1065 = vadd.f32 %v1027, %v1051
          %v1066 = vadd.f32 %v1028, %v1050
          %v1067 = vadd.f32 %v1029, %v1051
          %v1068 = vadd.f32 %v1030, %v1050
          %v1069 = vadd.f32 %v1031, %v1051
          %v1070 = vadd.f32 %v1032, %v1050
          %v1071 = vadd.f32 %v1033, %v1051
          %v1072 = vadd.f32 %v1034, %v1050
          %v1073 = vadd.f32 %v1035, %v1051
          %v1074 = vadd.f32 %v1036, %v1050
          %v1075 = vadd.f32 %v1037, %v1051
          %v1076 = vadd.f32 %v1038, %v1050
          %v1077 = vadd.f32 %v1039, %v1051
          %v1078 = vadd.f32 %v1040, %v1050
          %v1079 = vadd.f32 %v1041, %v1051
          %v1080 = vadd.f32 %v1042, %v1050
          %v1081 = vadd.f32 %v1043, %v1051
          %v1082 = vadd.f32 %v1044, %v1050
          %v1083 = vadd.f32 %v1045, %v1051
          %v1084 = vadd.f32 %v1046, %v1050
          %v1085 = vadd.f32 %v1047, %v1051
          %v1086 = vmax.f32 %v1054, 0.0
          %v1087 = vmax.f32 %v1055, 0.0
          %v1088 = vmax.f32 %v1056, 0.0
          %v1089 = vmax.f32 %v1057, 0.0
          %v1090 = vmax.f32 %v1058, 0.0
          %v1091 = vmax.f32 %v1059, 0.0
          %v1092 = vmax.f32 %v1060, 0.0
          %v1093 = vmax.f32 %v1061, 0.0
          %v1094 = vmax.f32 %v1062, 0.0
          %v1095 = vmax.f32 %v1063, 0.0
          %v1096 = vmax.f32 %v1064, 0.0
          %v1097 = vmax.f32 %v1065, 0.0
          %v1098 = vmax.f32 %v1066, 0.0
          %v1099 = vmax.f32 %v1067, 0.0
          %v1100 = vmax.f32 %v1068, 0.0
          %v1101 = vmax.f32 %v1069, 0.0
          %v1102 = vmax.f32 %v1070, 0.0
          %v1103 = vmax.f32 %v1071, 0.0
          %v1104 = vmax.f32 %v1072, 0.0
          %v1105 = vmax.f32 %v1073, 0.0
          %v1106 = vmax.f32 %v1074, 0.0
          %v1107 = vmax.f32 %v1075, 0.0
          %v1108 = vmax.f32 %v1076, 0.0
          %v1109 = vmax.f32 %v1077, 0.0
          %v1110 = vmax.f32 %v1078, 0.0
          %v1111 = vmax.f32 %v1079, 0.0
          %v1112 = vmax.f32 %v1080, 0.0
          %v1113 = vmax.f32 %v1081, 0.0
          %v1114 = vmax.f32 %v1082, 0.0
          %v1115 = vmax.f32 %v1083, 0.0
          %v1116 = vmax.f32 %v1084, 0.0
          %v1117 = vmax.f32 %v1085, 0.0
          %v1118 = vpack.c.bf16 %v1088, %v1086
          %v1119 = vpack.c.bf16 %v1089, %v1087
          %v1120 = vpack.c.bf16 %v1092, %v1090
          %v1121 = vpack.c.bf16 %v1093, %v1091
          %v1122 = vpack.c.bf16 %v1096, %v1094
          %v1123 = vpack.c.bf16 %v1097, %v1095
          %v1124 = vpack.c.bf16 %v1100, %v1098
          %v1125 = vpack.c.bf16 %v1101, %v1099
          %v1126 = vpack.c.bf16 %v1104, %v1102
          %v1127 = vpack.c.bf16 %v1105, %v1103
          %v1128 = vpack.c.bf16 %v1108, %v1106
          %v1129 = vpack.c.bf16 %v1109, %v1107
          %v1130 = vpack.c.bf16 %v1112, %v1110
          %v1131 = vpack.c.bf16 %v1113, %v1111
          %v1132 = vpack.c.bf16 %v1116, %v1114
          %v1133 = vpack.c.bf16 %v1117, %v1115
          %v1134 = vld [vmem:[#allocation10] sm:$0xf]
          %v1135 = vld [vmem:[#allocation10 + $0x4] sm:$0xf]
          %v1136 = vld [vmem:[#allocation10 + $0x8] sm:$0xf]
          %v1137 = vld [vmem:[#allocation10 + $0xc] sm:$0xf]
          %v1138 = vld [vmem:[#allocation10 + $0x10] sm:$0xf]
          %v1139 = vld [vmem:[#allocation10 + $0x14] sm:$0xf]
          %v1140 = vld [vmem:[#allocation10 + $0x18] sm:$0xf]
          %v1141 = vld [vmem:[#allocation10 + $0x1c] sm:$0xf]
          %v1142 = vld [vmem:[#allocation10 + $0x20] sm:$0xf]
          %v1143 = vld [vmem:[#allocation10 + $0x24] sm:$0xf]
          %v1144 = vld [vmem:[#allocation10 + $0x28] sm:$0xf]
          %v1145 = vld [vmem:[#allocation10 + $0x2c] sm:$0xf]
          %v1146 = vld [vmem:[#allocation10 + $0x30] sm:$0xf]
          %v1147 = vld [vmem:[#allocation10 + $0x34] sm:$0xf]
          %v1148 = vld [vmem:[#allocation10 + $0x38] sm:$0xf]
          %v1149 = vld [vmem:[#allocation10 + $0x3c] sm:$0xf]
          %v1150 = vld [vmem:[#allocation10 + $0x40] sm:$0xf]
          %v1151 = vld [vmem:[#allocation10 + $0x44] sm:$0xf]
          %v1152 = vld [vmem:[#allocation10 + $0x48] sm:$0xf]
          %v1153 = vld [vmem:[#allocation10 + $0x4c] sm:$0xf]
          %v1154 = vld [vmem:[#allocation10 + $0x50] sm:$0xf]
          %v1155 = vld [vmem:[#allocation10 + $0x54] sm:$0xf]
          %v1156 = vld [vmem:[#allocation10 + $0x58] sm:$0xf]
          %v1157 = vld [vmem:[#allocation10 + $0x5c] sm:$0xf]
          %v1158 = vld [vmem:[#allocation10 + $0x60] sm:$0xf]
          %v1159 = vld [vmem:[#allocation10 + $0x64] sm:$0xf]
          %v1160 = vld [vmem:[#allocation10 + $0x68] sm:$0xf]
          %v1161 = vld [vmem:[#allocation10 + $0x6c] sm:$0xf]
          %v1162 = vld [vmem:[#allocation10 + $0x70] sm:$0xf]
          %v1163 = vld [vmem:[#allocation10 + $0x74] sm:$0xf]
          %v1164 = vld [vmem:[#allocation10 + $0x78] sm:$0xf]
          %v1165 = vld [vmem:[#allocation10 + $0x7c] sm:$0xf]
          %v1166 = vld [vmem:[%s5] sm:$0x1]
          %v1168 = vperm.slane %v1166, 0
          %v1202 = vunpack.c.l.b16 %v1134
          %v1203 = vunpack.c.l.b16 %v1135
          %v1204 = vunpack.c.l.b16 %v1136
          %v1205 = vunpack.c.l.b16 %v1137
          %v1206 = vunpack.c.l.b16 %v1138
          %v1207 = vunpack.c.l.b16 %v1139
          %v1208 = vunpack.c.l.b16 %v1140
          %v1209 = vunpack.c.l.b16 %v1141
          %v1210 = vunpack.c.l.b16 %v1142
          %v1211 = vunpack.c.l.b16 %v1143
          %v1212 = vunpack.c.l.b16 %v1144
          %v1213 = vunpack.c.l.b16 %v1145
          %v1214 = vunpack.c.l.b16 %v1146
          %v1215 = vunpack.c.l.b16 %v1147
          %v1216 = vunpack.c.l.b16 %v1148
          %v1217 = vunpack.c.l.b16 %v1149
          %v1218 = vunpack.c.l.b16 %v1150
          %v1219 = vunpack.c.l.b16 %v1151
          %v1220 = vunpack.c.l.b16 %v1152
          %v1221 = vunpack.c.l.b16 %v1153
          %v1222 = vunpack.c.l.b16 %v1154
          %v1223 = vunpack.c.l.b16 %v1155
          %v1224 = vunpack.c.l.b16 %v1156
          %v1225 = vunpack.c.l.b16 %v1157
          %v1226 = vunpack.c.l.b16 %v1158
          %v1227 = vunpack.c.l.b16 %v1159
          %v1228 = vunpack.c.l.b16 %v1160
          %v1229 = vunpack.c.l.b16 %v1161
          %v1230 = vunpack.c.l.b16 %v1162
          %v1231 = vunpack.c.l.b16 %v1163
          %v1232 = vunpack.c.l.b16 %v1164
          %v1233 = vunpack.c.l.b16 %v1165
          %v1234 = vpack.c.b16 %v1203, %v1202
          %v1235 = vpack.c.b16 %v1205, %v1204
          %v1236 = vpack.c.b16 %v1207, %v1206
          %v1237 = vpack.c.b16 %v1209, %v1208
          %v1238 = vpack.c.b16 %v1211, %v1210
          %v1239 = vpack.c.b16 %v1213, %v1212
          %v1240 = vpack.c.b16 %v1215, %v1214
          %v1241 = vpack.c.b16 %v1217, %v1216
          %v1242 = vpack.c.b16 %v1219, %v1218
          %v1243 = vpack.c.b16 %v1221, %v1220
          %v1244 = vpack.c.b16 %v1223, %v1222
          %v1245 = vpack.c.b16 %v1225, %v1224
          %v1246 = vpack.c.b16 %v1227, %v1226
          %v1247 = vpack.c.b16 %v1229, %v1228
          %v1248 = vpack.c.b16 %v1231, %v1230
          %v1249 = vpack.c.b16 %v1233, %v1232
          %1266 = vmatpush.bf16.msra.mxu0 %v1241
          %1267 = vmatpush.bf16.msra.mxu0 %v1240
          %1268 = vmatpush.bf16.msra.mxu0 %v1239
          %1269 = vmatpush.bf16.msra.mxu0 %v1238
          %1270 = vmatpush.bf16.msra.mxu0 %v1237
          %1271 = vmatpush.bf16.msra.mxu0 %v1236
          %1272 = vmatpush.bf16.msra.mxu0 %v1235
          %1273 = vmatpush.bf16.msra.mxu0 %v1234
          %1274 = vmatmul.bf16.gmra.mxu0 %v1118
          %v1275 = vpop.f32.mrf.mxu0
          %v1276 = vadd.f32 %v1168, %v1275
          %v1277 = vpop.f32.mrf.mxu0
          %v1278 = vadd.f32 %v1168, %v1277
          %1279 = vmatmul.bf16.gmra.mxu0 %v1120
          %v1280 = vpop.f32.mrf.mxu0
          %v1281 = vadd.f32 %v1168, %v1280
          %v1282 = vpop.f32.mrf.mxu0
          %v1283 = vadd.f32 %v1168, %v1282
          %1284 = vmatmul.bf16.gmra.mxu0 %v1122
          %v1285 = vpop.f32.mrf.mxu0
          %v1286 = vadd.f32 %v1168, %v1285
          %v1287 = vpop.f32.mrf.mxu0
          %v1288 = vadd.f32 %v1168, %v1287
          %1289 = vmatmul.bf16.gmra.mxu0 %v1124
          %v1290 = vpop.f32.mrf.mxu0
          %v1291 = vadd.f32 %v1168, %v1290
          %v1292 = vpop.f32.mrf.mxu0
          %v1293 = vadd.f32 %v1168, %v1292
          %1294 = vmatmul.bf16.gmra.mxu0 %v1126
          %v1295 = vpop.f32.mrf.mxu0
          %v1296 = vadd.f32 %v1168, %v1295
          %v1297 = vpop.f32.mrf.mxu0
          %v1298 = vadd.f32 %v1168, %v1297
          %1299 = vmatmul.bf16.gmra.mxu0 %v1128
          %v1300 = vpop.f32.mrf.mxu0
          %v1301 = vadd.f32 %v1168, %v1300
          %v1302 = vpop.f32.mrf.mxu0
          %v1303 = vadd.f32 %v1168, %v1302
          %1304 = vmatmul.bf16.gmra.mxu0 %v1130
          %v1305 = vpop.f32.mrf.mxu0
          %v1306 = vadd.f32 %v1168, %v1305
          %v1307 = vpop.f32.mrf.mxu0
          %v1308 = vadd.f32 %v1168, %v1307
          %1309 = vmatmul.bf16.gmra.mxu0 %v1132
          %v1310 = vpop.f32.mrf.mxu0
          %v1311 = vadd.f32 %v1168, %v1310
          %v1312 = vpop.f32.mrf.mxu0
          %v1313 = vadd.f32 %v1168, %v1312
          %1314 = vdwg.mxu0
          %1315 = vmatpush.bf16.msra.mxu0 %v1249
          %1316 = vmatpush.bf16.msra.mxu0 %v1248
          %1317 = vmatpush.bf16.msra.mxu0 %v1247
          %1318 = vmatpush.bf16.msra.mxu0 %v1246
          %1319 = vmatpush.bf16.msra.mxu0 %v1245
          %1320 = vmatpush.bf16.msra.mxu0 %v1244
          %1321 = vmatpush.bf16.msra.mxu0 %v1243
          %1322 = vmatpush.bf16.msra.mxu0 %v1242
          %1323 = vmatmul.bf16.gmra.mxu0 %v1119
          %v1324 = vpop.f32.mrf.mxu0
          %v1325 = vadd.f32 %v1276, %v1324
          %v1326 = vpop.f32.mrf.mxu0
          %v1327 = vadd.f32 %v1278, %v1326
          %1328 = vmatmul.bf16.gmra.mxu0 %v1121
          %v1329 = vpop.f32.mrf.mxu0
          %v1330 = vadd.f32 %v1281, %v1329
          %v1331 = vpop.f32.mrf.mxu0
          %v1332 = vadd.f32 %v1283, %v1331
          %1333 = vmatmul.bf16.gmra.mxu0 %v1123
          %v1334 = vpop.f32.mrf.mxu0
          %v1335 = vadd.f32 %v1286, %v1334
          %v1336 = vpop.f32.mrf.mxu0
          %v1337 = vadd.f32 %v1288, %v1336
          %1338 = vmatmul.bf16.gmra.mxu0 %v1125
          %v1339 = vpop.f32.mrf.mxu0
          %v1340 = vadd.f32 %v1291, %v1339
          %v1341 = vpop.f32.mrf.mxu0
          %v1342 = vadd.f32 %v1293, %v1341
          %1343 = vmatmul.bf16.gmra.mxu0 %v1127
          %v1344 = vpop.f32.mrf.mxu0
          %v1345 = vadd.f32 %v1296, %v1344
          %v1346 = vpop.f32.mrf.mxu0
          %v1347 = vadd.f32 %v1298, %v1346
          %1348 = vmatmul.bf16.gmra.mxu0 %v1129
          %v1349 = vpop.f32.mrf.mxu0
          %v1350 = vadd.f32 %v1301, %v1349
          %v1351 = vpop.f32.mrf.mxu0
          %v1352 = vadd.f32 %v1303, %v1351
          %1353 = vmatmul.bf16.gmra.mxu0 %v1131
          %v1354 = vpop.f32.mrf.mxu0
          %v1355 = vadd.f32 %v1306, %v1354
          %v1356 = vpop.f32.mrf.mxu0
          %v1357 = vadd.f32 %v1308, %v1356
          %1358 = vmatmul.bf16.gmra.mxu0 %v1133
          %v1359 = vpop.f32.mrf.mxu0
          %v1360 = vadd.f32 %v1311, %v1359
          %v1361 = vpop.f32.mrf.mxu0
          %v1362 = vadd.f32 %v1313, %v1361
          %1363 = vdwg.mxu0
          %1364 = vst [vmem:[%s334] sm:$0xff] %v1325
          %1365 = vst [vmem:[%s334 + $0x8] sm:$0xff] %v1327
          %1366 = vst [vmem:[%s334 + $0x10] sm:$0xff] %v1330
          %1367 = vst [vmem:[%s334 + $0x18] sm:$0xff] %v1332
          %1368 = vst [vmem:[%s334 + $0x20] sm:$0xff] %v1335
          %1369 = vst [vmem:[%s334 + $0x28] sm:$0xff] %v1337
          %1370 = vst [vmem:[%s334 + $0x30] sm:$0xff] %v1340
          %1371 = vst [vmem:[%s334 + $0x38] sm:$0xff] %v1342
          %1372 = vst [vmem:[%s334 + $0x40] sm:$0xff] %v1345
          %1373 = vst [vmem:[%s334 + $0x48] sm:$0xff] %v1347
          %1374 = vst [vmem:[%s334 + $0x50] sm:$0xff] %v1350
          %1375 = vst [vmem:[%s334 + $0x58] sm:$0xff] %v1352
          %1376 = vst [vmem:[%s334 + $0x60] sm:$0xff] %v1355
          %1377 = vst [vmem:[%s334 + $0x68] sm:$0xff] %v1357
          %1378 = vst [vmem:[%s334 + $0x70] sm:$0xff] %v1360
          %1379 = vst [vmem:[%s334 + $0x78] sm:$0xff] %v1362
        $region72: #{tpu_custom_call.1} parent=43 // pred_fallthru
          _
        %s1380 = sand.u32 %s178, 1
        %s1381 = scalar_lea.sflag [#allocation6], %s1380
        %s1382 = sand.u32 %s178, 1
        %s1383 = smul.addr %s1382, 128
        %s1384 = scalar_lea.vmem [#allocation12], %s1383
        // Predicated region
        $region77: #{tpu_custom_call.1} parent=43 // pred_check
          %p1385 = pneg %p188
        $region78: #{tpu_custom_call.1} parent=43 // pred_check_branch
          %1387 = sbr.rel (%p1385) target = $region80
        $region79: #{tpu_custom_call.1} parent=43 // pred_region
          %s1388 = smul.u32 %s30, %s29
          %s1389 = smul.u32 16, %s1388
          %1391 = vsyncadd %s1381, 0
          %s1392 = smul.addr %s1389, 8
          %s1393 = scalar_lea.hbm %s6, %s1392
          %s1394 = sshll.u32 %s1384, 4
          %s1395 = int_to_ptr.vmem [resolvable:$true] %s1394
          %s1396 = sshll.u32 %s1393, 4
          %s1397 = int_to_ptr.hbm [resolvable:$true] %s1396
          %1402 = dma.vmem_to_hbm [thread:$0]  %s1395, 2048, %s1397, %s1381, 128, 128, 8
        $region80: #{tpu_custom_call.1} parent=43 // pred_fallthru
          _
      $region44: #{tpu_custom_call.1} parent=5 // pred_fallthru
        _
      %p1403 = scmp.le.s32.totalorder 2, %s20
      // Predicated region
      $region81: #{tpu_custom_call.1} parent=5 // pred_check
        %p1404 = pneg %p1403
      $region82: #{tpu_custom_call.1} parent=5 // pred_check_branch
        %1406 = sbr.rel (%p1404) target = $region84
      $region83: #{tpu_custom_call.1} parent=5 // pred_region
        %s1407 = ssub.s32 %s20, 2
        // Predicated region
        $region85: #{tpu_custom_call.1} parent=83 // pred_check
          %p1408 = pneg %p194
        $region86: #{tpu_custom_call.1} parent=83 // pred_check_branch
          %1410 = sbr.rel (%p1408) target = $region88
        $region87: #{tpu_custom_call.1} parent=83 // pred_region
          %s1411 = sand.u32 %s179, 1
          %s1412 = scalar_lea.sflag [#allocation6], %s1411
          %s1413 = sand.u32 %s179, 1
          %s1414 = smul.addr %s1413, 128
          %s1415 = scalar_lea.vmem [#allocation12], %s1414
          %1417 = dma.done %s1412, 2048
        $region88: #{tpu_custom_call.1} parent=83 // pred_fallthru
          _
      $region84: #{tpu_custom_call.1} parent=5 // pred_fallthru
        _
    $region6: #{tpu_custom_call.1} parent=1 // loop_footer
      %s24 = sadd.s32 1, %s20
    $region7: #{tpu_custom_call.1} parent=1 // loop_footer_branch
      %19 = sbr.rel target = $region3
    $region8: #{tpu_custom_call.1} parent=1 // loop_exit
      _
    %1418 = vsyncpa [#allocation5], 1
    %s1419 = scalar_lea.sflag [#allocation5], 1
    %1420 = vsyncpa %s1419, 1
    %1421 = vsyncpa [#allocation8], 1
    %1422 = vsyncpa [#allocation11], 1
    %1423 = vsyncpa [#allocation6], 1
    %s1424 = scalar_lea.sflag [#allocation6], 1
    %1425 = vsyncpa %s1424, 1

</llo_original>
